<compile_context>
chip_gen: v5e
topology: v5e:2x2
jax: 0.10.0
libtpu: 0.0.40
codegen_flags: <defaults>
</compile_context>

<pallas_src>
import functools

import jax
import jax.numpy as jnp
from jax import lax
from jax.experimental import pallas as pl
from jax.experimental.pallas import tpu as pltpu


def _round_up(x, m):
    return ((x + m - 1) // m) * m


def _fused_srcnn_kernel(*refs, W, HW, B, BN, deeper):
    """Fused conv1 -> relu -> [conv3 -> relu ->] conv2 for BN NCHW images.

    Activations are channel-major with spatial flattened at the natural stride
    W (length HW = H*W).  The input block and the hidden scratch hold the flat
    activation at lane offset B (128-aligned, B >= W+1) inside a zero border,
    so a 3x3 tap (kh, kw) is the constant lane shift (kh-1)*W + (kw-1) and
    vertical out-of-range reads land on zeros.  Horizontal wrap-around (w==0
    reading the previous row's last column, w==W-1 reading the next row's
    first column) is removed by masking the kw=0 / kw=2 partial sums.
    """
    if deeper:
        (x_ref, m_ref, w1_ref, b1_ref, w3_ref, b3_ref, w2_ref, b2_ref,
         o_ref, pad_h) = refs
    else:
        (x_ref, m_ref, w1_ref, b1_ref, w2_ref, b2_ref, o_ref, pad_h) = refs
        w3_ref = b3_ref = None

    nch, LFLAT = pad_h.shape
    mask_l = m_ref[0:1, :]   # (1, HW): 0 where w == 0
    mask_r = m_ref[1:2, :]   # (1, HW): 0 where w == W-1

    def conv3x3(read_tap, w_ref, b_ref):
        # 9 accumulating small dots; no materialized im2col copy.
        accs = []
        for kw in range(3):
            acc = None
            for kh in range(3):
                t = kh * 3 + kw
                s = (kh - 1) * W + (kw - 1)
                d = jnp.dot(w_ref[t], read_tap(s),
                            preferred_element_type=jnp.float32)
                acc = d if acc is None else acc + d
            accs.append(acc)
        return accs[1] + accs[0] * mask_l + accs[2] * mask_r + b_ref[...]

    # Zero only the border regions of the hidden scratch; the interior
    # [B, B+HW) is fully overwritten every layer.  Done every grid step on
    # purpose (each core has its own scratch under "parallel" semantics).
    pad_h[:, 0:B] = jnp.zeros((nch, B), pad_h.dtype)
    pad_h[:, B + HW:LFLAT] = jnp.zeros((nch, LFLAT - B - HW), pad_h.dtype)

    def h_tap(s):
        return pad_h[:, B + s: B + s + HW]

    for n in range(BN):  # images of this grid step (BN is small; static unroll)
        def x_tap(s, n=n):
            return x_ref[n, :, B + s: B + s + HW]

        h = conv3x3(x_tap, w1_ref, b1_ref)
        pad_h[:, B:B + HW] = jnp.maximum(h, 0.0)        # aligned, unmasked store
        if deeper:
            h = conv3x3(h_tap, w3_ref, b3_ref)
            pad_h[:, B:B + HW] = jnp.maximum(h, 0.0)
        y = conv3x3(h_tap, w2_ref, b2_ref)
        o_ref[n] = y.astype(o_ref.dtype)                # lane-dense (cin, HW)


def _split_w(w_oihw):
    """PyTorch OIHW (Cout, Cin, 3, 3) -> (9, Cout, Cin); tap index = kh*3+kw."""
    cout, cin = w_oihw.shape[:2]
    return jnp.transpose(w_oihw, (2, 3, 0, 1)).reshape(9, cout, cin)


def error_calibration_forward(x_nchw, params, deeper=False):
    """Matches error_calibration_module.forward (NCHW in, NCHW out)."""
    N, cin, H, W = x_nchw.shape
    nch = params["w1"].shape[0]
    HW = H * W
    B = _round_up(W + 1, 128)                 # 128-aligned interior base >= W+1
    LFLAT = _round_up(B + HW + W + 1, 128)    # flat padded activation length

    # images per grid step (amortizes per-step / DMA-setup overhead)
    BN = 1
    for cand in (8, 4, 2, 1):
        if N % cand == 0:
            BN = cand
            break

    # one cheap wrapper pad: data at [B, B+HW), zeros elsewhere (top/bottom halo)
    x_flat = x_nchw.reshape(N, cin, HW)                 # free reshape
    x_pad = jnp.pad(x_flat, ((0, 0), (0, 0), (B, LFLAT - B - HW)))

    col = jnp.arange(HW, dtype=jnp.int32) % W
    masks = jnp.stack([(col != 0), (col != W - 1)], axis=0).astype(x_nchw.dtype)

    w1 = _split_w(params["w1"]); b1 = params["b1"].reshape(nch, 1)
    w2 = _split_w(params["w2"]); b2 = params["b2"].reshape(cin, 1)

    inputs = [x_pad, masks, w1, b1]
    in_specs = [
        pl.BlockSpec((BN, cin, LFLAT), lambda n: (n, 0, 0)),
        pl.BlockSpec((2, HW), lambda n: (0, 0)),
        pl.BlockSpec(w1.shape, lambda n: (0, 0, 0)),
        pl.BlockSpec(b1.shape, lambda n: (0, 0)),
    ]
    if deeper:
        w3 = _split_w(params["w3"]); b3 = params["b3"].reshape(nch, 1)
        inputs += [w3, b3]
        in_specs += [pl.BlockSpec(w3.shape, lambda n: (0, 0, 0)),
                     pl.BlockSpec(b3.shape, lambda n: (0, 0))]
    inputs += [w2, b2]
    in_specs += [pl.BlockSpec(w2.shape, lambda n: (0, 0, 0)),
                 pl.BlockSpec(b2.shape, lambda n: (0, 0))]

    # explicit VMEM budget (double-buffered blocks + weights + hidden scratch)
    w_elems = w1.size + w2.size + (w3.size if deeper else 0)
    b_elems = nch + cin + (nch if deeper else 0)
    vmem_bytes = 4 * (2 * BN * cin * LFLAT        # input blocks (x2 buffers)
                      + 2 * BN * cin * HW         # output blocks (x2 buffers)
                      + 2 * 2 * HW                # masks
                      + 2 * (w_elems + b_elems)   # weights / biases
                      + nch * LFLAT)              # hidden scratch
    vmem_limit = int(min(max(4 * vmem_bytes, 4 << 20), 64 << 20))

    kernel = functools.partial(_fused_srcnn_kernel, W=W, HW=HW, B=B, BN=BN,
                               deeper=deeper)
    y_flat = pl.pallas_call(
        kernel,
        out_shape=jax.ShapeDtypeStruct((N, cin, HW), x_nchw.dtype),
        grid=(N // BN,),
        in_specs=in_specs,
        out_specs=pl.BlockSpec((BN, cin, HW), lambda n: (n, 0, 0)),
        scratch_shapes=[pltpu.VMEM((nch, LFLAT), jnp.float32)],
        compiler_params=pltpu.CompilerParams(
            dimension_semantics=("parallel",),     # shard batch over TCs
            vmem_limit_bytes=vmem_limit),
    )(*inputs)

    return y_flat.reshape(N, cin, H, W)            # free reshape, no slice


def init_params(key, input_channels, num_channels):
    """Deterministic parameter init. Weights stored in PyTorch OIHW layout."""
    ks = jax.random.split(key, 6)

    def w(k, cout, cin):
        return (jax.random.normal(k, (cout, cin, 3, 3), jnp.float32)
                * (1.0 / (9.0 * cin)) ** 0.5)

    def bias(k, cout):
        return jax.random.normal(k, (cout,), jnp.float32) * 0.01

    return {
        "w1": w(ks[0], num_channels, input_channels), "b1": bias(ks[1], num_channels),
        "w2": w(ks[2], input_channels, num_channels), "b2": bias(ks[3], input_channels),
        "w3": w(ks[4], num_channels, num_channels),   "b3": bias(ks[5], num_channels),
    }


def _ref_conv3x3(x_nchw, w_oihw, b, relu):
    y = lax.conv_general_dilated(
        x_nchw, w_oihw, window_strides=(1, 1), padding="SAME",
        dimension_numbers=("NCHW", "OIHW", "NCHW"))
    y = y + b[None, :, None, None]
    return jnp.maximum(y, 0.0) if relu else y


def _ref_forward(x_nchw, params, deeper=False):
    h = _ref_conv3x3(x_nchw, params["w1"], params["b1"], True)
    if deeper:
        h = _ref_conv3x3(h, params["w3"], params["b3"], True)
    return _ref_conv3x3(h, params["w2"], params["b2"], False)


if __name__ == "__main__":
    key = jax.random.PRNGKey(0)
    k_x, k_p = jax.random.split(key)

    # small shapes consistent with the module
    N, input_channels, H, W = 2, 4, 16, 16
    num_channels = 8

    x = jax.random.normal(k_x, (N, input_channels, H, W), jnp.float32)
    params = init_params(k_p, input_channels, num_channels)

    for deeper in (False, True):
        out = jax.block_until_ready(
            error_calibration_forward(x, params, deeper=deeper))
        ref = jax.block_until_ready(_ref_forward(x, params, deeper=deeper))
        assert out.shape == (N, input_channels, H, W)
        err = jnp.max(jnp.abs(out - ref))
        assert jnp.allclose(out, ref, atol=1e-4, rtol=1e-4), (
            f"mismatch (deeper={deeper}): {err}")

    print("KERNEL_OK")
</pallas_src>

<mosaic_0001>
module attributes {stable_mosaic.version = 11 : i64} {
  func.func @_fused_srcnn_kernel(%arg0: i32, %arg1: memref<2x4x512xf32, #tpu.memory_space<vmem>>, %arg2: memref<2x256xf32, #tpu.memory_space<vmem>>, %arg3: memref<9x8x4xf32, #tpu.memory_space<vmem>>, %arg4: memref<8x1xf32, #tpu.memory_space<vmem>>, %arg5: memref<9x4x8xf32, #tpu.memory_space<vmem>>, %arg6: memref<4x1xf32, #tpu.memory_space<vmem>>, %arg7: memref<2x4x256xf32, #tpu.memory_space<vmem>>, %arg8: memref<8x512xf32, #tpu.memory_space<vmem>>) attributes {dimension_semantics = [#tpu.dimension_semantics<parallel>], iteration_bounds = array<i64: 1>, scalar_prefetch = 0 : i64, scratch_operands = 1 : i64, tpu.core_type = #tpu.core_type<tc>, window_params = [{transform_indices = @transform_0, window_bounds = array<i64: 2, 4, 512>}, {pipeline_mode = #tpu.pipeline_mode<synchronous>, transform_indices = @transform_1, window_bounds = array<i64: 2, 256>}, {pipeline_mode = #tpu.pipeline_mode<synchronous>, transform_indices = @transform_2, window_bounds = array<i64: 9, 8, 4>}, {pipeline_mode = #tpu.pipeline_mode<synchronous>, transform_indices = @transform_3, window_bounds = array<i64: 8, 1>}, {pipeline_mode = #tpu.pipeline_mode<synchronous>, transform_indices = @transform_4, window_bounds = array<i64: 9, 4, 8>}, {pipeline_mode = #tpu.pipeline_mode<synchronous>, transform_indices = @transform_5, window_bounds = array<i64: 4, 1>}, {transform_indices = @transform_6, window_bounds = array<i64: 2, 4, 256>}]} {
    %c0 = arith.constant 0 : index
    %c0_0 = arith.constant 0 : index
    %0 = vector.load %arg2[%c0, %c0_0] : memref<2x256xf32, #tpu.memory_space<vmem>>, vector<1x256xf32>
    %c1 = arith.constant 1 : index
    %c0_1 = arith.constant 0 : index
    %1 = vector.load %arg2[%c1, %c0_1] : memref<2x256xf32, #tpu.memory_space<vmem>>, vector<1x256xf32>
    %cst = arith.constant 0.000000e+00 : f32
    %2 = vector.broadcast %cst : f32 to vector<8x128xf32>
    %c0_2 = arith.constant 0 : index
    %c0_3 = arith.constant 0 : index
    %3 = vector.load %arg8[%c0_2, %c0_3] : memref<8x512xf32, #tpu.memory_space<vmem>>, vector<8x128xf32>
    tpu.vector_store %arg8[%c0_2, %c0_3], %2 {strides = array<i32>} : memref<8x512xf32, #tpu.memory_space<vmem>>, vector<8x128xf32>,
    %cst_4 = arith.constant 0.000000e+00 : f32
    %4 = vector.broadcast %cst_4 : f32 to vector<8x128xf32>
    %c0_5 = arith.constant 0 : index
    %c384 = arith.constant 384 : index
    %5 = vector.load %arg8[%c0_5, %c384] : memref<8x512xf32, #tpu.memory_space<vmem>>, vector<8x128xf32>
    tpu.vector_store %arg8[%c0_5, %c384], %4 {strides = array<i32>} : memref<8x512xf32, #tpu.memory_space<vmem>>, vector<8x128xf32>,
    %c0_6 = arith.constant 0 : index
    %c0_7 = arith.constant 0 : index
    %c0_8 = arith.constant 0 : index
    %6 = vector.load %arg3[%c0_6, %c0_7, %c0_8] : memref<9x8x4xf32, #tpu.memory_space<vmem>>, vector<1x8x4xf32>
    %7 = vector.shape_cast %6 : vector<1x8x4xf32> to vector<8x4xf32>
    %c0_9 = arith.constant 0 : index
    %c0_10 = arith.constant 0 : index
    %c111 = arith.constant 111 : index
    %8 = vector.load %arg1[%c0_9, %c0_10, %c111] : memref<2x4x512xf32, #tpu.memory_space<vmem>>, vector<1x4x256xf32>
    %9 = vector.shape_cast %8 : vector<1x4x256xf32> to vector<4x256xf32>
    %cst_11 = arith.constant dense<0.000000e+00> : vector<8x256xf32>
    %10 = tpu.matmul %7, %9, %cst_11 {dimension_numbers = #tpu.dot_dimension_numbers<[1], [0], [0], [1], [0, 0, 1, 1], [], []>} : vector<8x4xf32>, vector<4x256xf32>, vector<8x256xf32> -> vector<8x256xf32>
    %c3 = arith.constant 3 : index
    %c0_12 = arith.constant 0 : index
    %c0_13 = arith.constant 0 : index
    %11 = vector.load %arg3[%c3, %c0_12, %c0_13] : memref<9x8x4xf32, #tpu.memory_space<vmem>>, vector<1x8x4xf32>
    %12 = vector.shape_cast %11 : vector<1x8x4xf32> to vector<8x4xf32>
    %c0_14 = arith.constant 0 : index
    %c0_15 = arith.constant 0 : index
    %c127 = arith.constant 127 : index
    %13 = vector.load %arg1[%c0_14, %c0_15, %c127] : memref<2x4x512xf32, #tpu.memory_space<vmem>>, vector<1x4x256xf32>
    %14 = vector.shape_cast %13 : vector<1x4x256xf32> to vector<4x256xf32>
    %cst_16 = arith.constant dense<0.000000e+00> : vector<8x256xf32>
    %15 = tpu.matmul %12, %14, %cst_16 {dimension_numbers = #tpu.dot_dimension_numbers<[1], [0], [0], [1], [0, 0, 1, 1], [], []>} : vector<8x4xf32>, vector<4x256xf32>, vector<8x256xf32> -> vector<8x256xf32>
    %16 = arith.addf %10, %15 : vector<8x256xf32>
    %c6 = arith.constant 6 : index
    %c0_17 = arith.constant 0 : index
    %c0_18 = arith.constant 0 : index
    %17 = vector.load %arg3[%c6, %c0_17, %c0_18] : memref<9x8x4xf32, #tpu.memory_space<vmem>>, vector<1x8x4xf32>
    %18 = vector.shape_cast %17 : vector<1x8x4xf32> to vector<8x4xf32>
    %c0_19 = arith.constant 0 : index
    %c0_20 = arith.constant 0 : index
    %c143 = arith.constant 143 : index
    %19 = vector.load %arg1[%c0_19, %c0_20, %c143] : memref<2x4x512xf32, #tpu.memory_space<vmem>>, vector<1x4x256xf32>
    %20 = vector.shape_cast %19 : vector<1x4x256xf32> to vector<4x256xf32>
    %cst_21 = arith.constant dense<0.000000e+00> : vector<8x256xf32>
    %21 = tpu.matmul %18, %20, %cst_21 {dimension_numbers = #tpu.dot_dimension_numbers<[1], [0], [0], [1], [0, 0, 1, 1], [], []>} : vector<8x4xf32>, vector<4x256xf32>, vector<8x256xf32> -> vector<8x256xf32>
    %22 = arith.addf %16, %21 : vector<8x256xf32>
    %c1_22 = arith.constant 1 : index
    %c0_23 = arith.constant 0 : index
    %c0_24 = arith.constant 0 : index
    %23 = vector.load %arg3[%c1_22, %c0_23, %c0_24] : memref<9x8x4xf32, #tpu.memory_space<vmem>>, vector<1x8x4xf32>
    %24 = vector.shape_cast %23 : vector<1x8x4xf32> to vector<8x4xf32>
    %c0_25 = arith.constant 0 : index
    %c0_26 = arith.constant 0 : index
    %c112 = arith.constant 112 : index
    %25 = vector.load %arg1[%c0_25, %c0_26, %c112] : memref<2x4x512xf32, #tpu.memory_space<vmem>>, vector<1x4x256xf32>
    %26 = vector.shape_cast %25 : vector<1x4x256xf32> to vector<4x256xf32>
    %cst_27 = arith.constant dense<0.000000e+00> : vector<8x256xf32>
    %27 = tpu.matmul %24, %26, %cst_27 {dimension_numbers = #tpu.dot_dimension_numbers<[1], [0], [0], [1], [0, 0, 1, 1], [], []>} : vector<8x4xf32>, vector<4x256xf32>, vector<8x256xf32> -> vector<8x256xf32>
    %c4 = arith.constant 4 : index
    %c0_28 = arith.constant 0 : index
    %c0_29 = arith.constant 0 : index
    %28 = vector.load %arg3[%c4, %c0_28, %c0_29] : memref<9x8x4xf32, #tpu.memory_space<vmem>>, vector<1x8x4xf32>
    %29 = vector.shape_cast %28 : vector<1x8x4xf32> to vector<8x4xf32>
    %c0_30 = arith.constant 0 : index
    %c0_31 = arith.constant 0 : index
    %c128 = arith.constant 128 : index
    %30 = vector.load %arg1[%c0_30, %c0_31, %c128] : memref<2x4x512xf32, #tpu.memory_space<vmem>>, vector<1x4x256xf32>
    %31 = vector.shape_cast %30 : vector<1x4x256xf32> to vector<4x256xf32>
    %cst_32 = arith.constant dense<0.000000e+00> : vector<8x256xf32>
    %32 = tpu.matmul %29, %31, %cst_32 {dimension_numbers = #tpu.dot_dimension_numbers<[1], [0], [0], [1], [0, 0, 1, 1], [], []>} : vector<8x4xf32>, vector<4x256xf32>, vector<8x256xf32> -> vector<8x256xf32>
    %33 = arith.addf %27, %32 : vector<8x256xf32>
    %c7 = arith.constant 7 : index
    %c0_33 = arith.constant 0 : index
    %c0_34 = arith.constant 0 : index
    %34 = vector.load %arg3[%c7, %c0_33, %c0_34] : memref<9x8x4xf32, #tpu.memory_space<vmem>>, vector<1x8x4xf32>
    %35 = vector.shape_cast %34 : vector<1x8x4xf32> to vector<8x4xf32>
    %c0_35 = arith.constant 0 : index
    %c0_36 = arith.constant 0 : index
    %c144 = arith.constant 144 : index
    %36 = vector.load %arg1[%c0_35, %c0_36, %c144] : memref<2x4x512xf32, #tpu.memory_space<vmem>>, vector<1x4x256xf32>
    %37 = vector.shape_cast %36 : vector<1x4x256xf32> to vector<4x256xf32>
    %cst_37 = arith.constant dense<0.000000e+00> : vector<8x256xf32>
    %38 = tpu.matmul %35, %37, %cst_37 {dimension_numbers = #tpu.dot_dimension_numbers<[1], [0], [0], [1], [0, 0, 1, 1], [], []>} : vector<8x4xf32>, vector<4x256xf32>, vector<8x256xf32> -> vector<8x256xf32>
    %39 = arith.addf %33, %38 : vector<8x256xf32>
    %c2 = arith.constant 2 : index
    %c0_38 = arith.constant 0 : index
    %c0_39 = arith.constant 0 : index
    %40 = vector.load %arg3[%c2, %c0_38, %c0_39] : memref<9x8x4xf32, #tpu.memory_space<vmem>>, vector<1x8x4xf32>
    %41 = vector.shape_cast %40 : vector<1x8x4xf32> to vector<8x4xf32>
    %c0_40 = arith.constant 0 : index
    %c0_41 = arith.constant 0 : index
    %c113 = arith.constant 113 : index
    %42 = vector.load %arg1[%c0_40, %c0_41, %c113] : memref<2x4x512xf32, #tpu.memory_space<vmem>>, vector<1x4x256xf32>
    %43 = vector.shape_cast %42 : vector<1x4x256xf32> to vector<4x256xf32>
    %cst_42 = arith.constant dense<0.000000e+00> : vector<8x256xf32>
    %44 = tpu.matmul %41, %43, %cst_42 {dimension_numbers = #tpu.dot_dimension_numbers<[1], [0], [0], [1], [0, 0, 1, 1], [], []>} : vector<8x4xf32>, vector<4x256xf32>, vector<8x256xf32> -> vector<8x256xf32>
    %c5 = arith.constant 5 : index
    %c0_43 = arith.constant 0 : index
    %c0_44 = arith.constant 0 : index
    %45 = vector.load %arg3[%c5, %c0_43, %c0_44] : memref<9x8x4xf32, #tpu.memory_space<vmem>>, vector<1x8x4xf32>
    %46 = vector.shape_cast %45 : vector<1x8x4xf32> to vector<8x4xf32>
    %c0_45 = arith.constant 0 : index
    %c0_46 = arith.constant 0 : index
    %c129 = arith.constant 129 : index
    %47 = vector.load %arg1[%c0_45, %c0_46, %c129] : memref<2x4x512xf32, #tpu.memory_space<vmem>>, vector<1x4x256xf32>
    %48 = vector.shape_cast %47 : vector<1x4x256xf32> to vector<4x256xf32>
    %cst_47 = arith.constant dense<0.000000e+00> : vector<8x256xf32>
    %49 = tpu.matmul %46, %48, %cst_47 {dimension_numbers = #tpu.dot_dimension_numbers<[1], [0], [0], [1], [0, 0, 1, 1], [], []>} : vector<8x4xf32>, vector<4x256xf32>, vector<8x256xf32> -> vector<8x256xf32>
    %50 = arith.addf %44, %49 : vector<8x256xf32>
    %c8 = arith.constant 8 : index
    %c0_48 = arith.constant 0 : index
    %c0_49 = arith.constant 0 : index
    %51 = vector.load %arg3[%c8, %c0_48, %c0_49] : memref<9x8x4xf32, #tpu.memory_space<vmem>>, vector<1x8x4xf32>
    %52 = vector.shape_cast %51 : vector<1x8x4xf32> to vector<8x4xf32>
    %c0_50 = arith.constant 0 : index
    %c0_51 = arith.constant 0 : index
    %c145 = arith.constant 145 : index
    %53 = vector.load %arg1[%c0_50, %c0_51, %c145] : memref<2x4x512xf32, #tpu.memory_space<vmem>>, vector<1x4x256xf32>
    %54 = vector.shape_cast %53 : vector<1x4x256xf32> to vector<4x256xf32>
    %cst_52 = arith.constant dense<0.000000e+00> : vector<8x256xf32>
    %55 = tpu.matmul %52, %54, %cst_52 {dimension_numbers = #tpu.dot_dimension_numbers<[1], [0], [0], [1], [0, 0, 1, 1], [], []>} : vector<8x4xf32>, vector<4x256xf32>, vector<8x256xf32> -> vector<8x256xf32>
    %56 = arith.addf %50, %55 : vector<8x256xf32>
    %57 = vector.broadcast %0 : vector<1x256xf32> to vector<8x256xf32>
    %58 = arith.mulf %22, %57 : vector<8x256xf32>
    %59 = arith.addf %39, %58 : vector<8x256xf32>
    %60 = vector.broadcast %1 : vector<1x256xf32> to vector<8x256xf32>
    %61 = arith.mulf %56, %60 : vector<8x256xf32>
    %62 = arith.addf %59, %61 : vector<8x256xf32>
    %c0_53 = arith.constant 0 : index
    %c0_54 = arith.constant 0 : index
    %63 = vector.load %arg4[%c0_53, %c0_54] : memref<8x1xf32, #tpu.memory_space<vmem>>, vector<8x1xf32>
    %64 = vector.broadcast %63 : vector<8x1xf32> to vector<8x256xf32>
    %65 = arith.addf %62, %64 : vector<8x256xf32>
    %cst_55 = arith.constant 0.000000e+00 : f32
    %66 = vector.broadcast %cst_55 : f32 to vector<8x256xf32>
    %67 = arith.maximumf %65, %66 : vector<8x256xf32>
    %c0_56 = arith.constant 0 : index
    %c128_57 = arith.constant 128 : index
    %68 = vector.load %arg8[%c0_56, %c128_57] : memref<8x512xf32, #tpu.memory_space<vmem>>, vector<8x256xf32>
    tpu.vector_store %arg8[%c0_56, %c128_57], %67 {strides = array<i32>} : memref<8x512xf32, #tpu.memory_space<vmem>>, vector<8x256xf32>,
    %c0_58 = arith.constant 0 : index
    %c0_59 = arith.constant 0 : index
    %c0_60 = arith.constant 0 : index
    %69 = vector.load %arg5[%c0_58, %c0_59, %c0_60] : memref<9x4x8xf32, #tpu.memory_space<vmem>>, vector<1x4x8xf32>
    %70 = vector.shape_cast %69 : vector<1x4x8xf32> to vector<4x8xf32>
    %c0_61 = arith.constant 0 : index
    %c111_62 = arith.constant 111 : index
    %71 = vector.load %arg8[%c0_61, %c111_62] : memref<8x512xf32, #tpu.memory_space<vmem>>, vector<8x256xf32>
    %cst_63 = arith.constant dense<0.000000e+00> : vector<4x256xf32>
    %72 = tpu.matmul %70, %71, %cst_63 {dimension_numbers = #tpu.dot_dimension_numbers<[1], [0], [0], [1], [0, 0, 1, 1], [], []>} : vector<4x8xf32>, vector<8x256xf32>, vector<4x256xf32> -> vector<4x256xf32>
    %c3_64 = arith.constant 3 : index
    %c0_65 = arith.constant 0 : index
    %c0_66 = arith.constant 0 : index
    %73 = vector.load %arg5[%c3_64, %c0_65, %c0_66] : memref<9x4x8xf32, #tpu.memory_space<vmem>>, vector<1x4x8xf32>
    %74 = vector.shape_cast %73 : vector<1x4x8xf32> to vector<4x8xf32>
    %c0_67 = arith.constant 0 : index
    %c127_68 = arith.constant 127 : index
    %75 = vector.load %arg8[%c0_67, %c127_68] : memref<8x512xf32, #tpu.memory_space<vmem>>, vector<8x256xf32>
    %cst_69 = arith.constant dense<0.000000e+00> : vector<4x256xf32>
    %76 = tpu.matmul %74, %75, %cst_69 {dimension_numbers = #tpu.dot_dimension_numbers<[1], [0], [0], [1], [0, 0, 1, 1], [], []>} : vector<4x8xf32>, vector<8x256xf32>, vector<4x256xf32> -> vector<4x256xf32>
    %77 = arith.addf %72, %76 : vector<4x256xf32>
    %c6_70 = arith.constant 6 : index
    %c0_71 = arith.constant 0 : index
    %c0_72 = arith.constant 0 : index
    %78 = vector.load %arg5[%c6_70, %c0_71, %c0_72] : memref<9x4x8xf32, #tpu.memory_space<vmem>>, vector<1x4x8xf32>
    %79 = vector.shape_cast %78 : vector<1x4x8xf32> to vector<4x8xf32>
    %c0_73 = arith.constant 0 : index
    %c143_74 = arith.constant 143 : index
    %80 = vector.load %arg8[%c0_73, %c143_74] : memref<8x512xf32, #tpu.memory_space<vmem>>, vector<8x256xf32>
    %cst_75 = arith.constant dense<0.000000e+00> : vector<4x256xf32>
    %81 = tpu.matmul %79, %80, %cst_75 {dimension_numbers = #tpu.dot_dimension_numbers<[1], [0], [0], [1], [0, 0, 1, 1], [], []>} : vector<4x8xf32>, vector<8x256xf32>, vector<4x256xf32> -> vector<4x256xf32>
    %82 = arith.addf %77, %81 : vector<4x256xf32>
    %c1_76 = arith.constant 1 : index
    %c0_77 = arith.constant 0 : index
    %c0_78 = arith.constant 0 : index
    %83 = vector.load %arg5[%c1_76, %c0_77, %c0_78] : memref<9x4x8xf32, #tpu.memory_space<vmem>>, vector<1x4x8xf32>
    %84 = vector.shape_cast %83 : vector<1x4x8xf32> to vector<4x8xf32>
    %c0_79 = arith.constant 0 : index
    %c112_80 = arith.constant 112 : index
    %85 = vector.load %arg8[%c0_79, %c112_80] : memref<8x512xf32, #tpu.memory_space<vmem>>, vector<8x256xf32>
    %cst_81 = arith.constant dense<0.000000e+00> : vector<4x256xf32>
    %86 = tpu.matmul %84, %85, %cst_81 {dimension_numbers = #tpu.dot_dimension_numbers<[1], [0], [0], [1], [0, 0, 1, 1], [], []>} : vector<4x8xf32>, vector<8x256xf32>, vector<4x256xf32> -> vector<4x256xf32>
    %c4_82 = arith.constant 4 : index
    %c0_83 = arith.constant 0 : index
    %c0_84 = arith.constant 0 : index
    %87 = vector.load %arg5[%c4_82, %c0_83, %c0_84] : memref<9x4x8xf32, #tpu.memory_space<vmem>>, vector<1x4x8xf32>
    %88 = vector.shape_cast %87 : vector<1x4x8xf32> to vector<4x8xf32>
    %c0_85 = arith.constant 0 : index
    %c128_86 = arith.constant 128 : index
    %89 = vector.load %arg8[%c0_85, %c128_86] : memref<8x512xf32, #tpu.memory_space<vmem>>, vector<8x256xf32>
    %cst_87 = arith.constant dense<0.000000e+00> : vector<4x256xf32>
    %90 = tpu.matmul %88, %89, %cst_87 {dimension_numbers = #tpu.dot_dimension_numbers<[1], [0], [0], [1], [0, 0, 1, 1], [], []>} : vector<4x8xf32>, vector<8x256xf32>, vector<4x256xf32> -> vector<4x256xf32>
    %91 = arith.addf %86, %90 : vector<4x256xf32>
    %c7_88 = arith.constant 7 : index
    %c0_89 = arith.constant 0 : index
    %c0_90 = arith.constant 0 : index
    %92 = vector.load %arg5[%c7_88, %c0_89, %c0_90] : memref<9x4x8xf32, #tpu.memory_space<vmem>>, vector<1x4x8xf32>
    %93 = vector.shape_cast %92 : vector<1x4x8xf32> to vector<4x8xf32>
    %c0_91 = arith.constant 0 : index
    %c144_92 = arith.constant 144 : index
    %94 = vector.load %arg8[%c0_91, %c144_92] : memref<8x512xf32, #tpu.memory_space<vmem>>, vector<8x256xf32>
    %cst_93 = arith.constant dense<0.000000e+00> : vector<4x256xf32>
    %95 = tpu.matmul %93, %94, %cst_93 {dimension_numbers = #tpu.dot_dimension_numbers<[1], [0], [0], [1], [0, 0, 1, 1], [], []>} : vector<4x8xf32>, vector<8x256xf32>, vector<4x256xf32> -> vector<4x256xf32>
    %96 = arith.addf %91, %95 : vector<4x256xf32>
    %c2_94 = arith.constant 2 : index
    %c0_95 = arith.constant 0 : index
    %c0_96 = arith.constant 0 : index
    %97 = vector.load %arg5[%c2_94, %c0_95, %c0_96] : memref<9x4x8xf32, #tpu.memory_space<vmem>>, vector<1x4x8xf32>
    %98 = vector.shape_cast %97 : vector<1x4x8xf32> to vector<4x8xf32>
    %c0_97 = arith.constant 0 : index
    %c113_98 = arith.constant 113 : index
    %99 = vector.load %arg8[%c0_97, %c113_98] : memref<8x512xf32, #tpu.memory_space<vmem>>, vector<8x256xf32>
    %cst_99 = arith.constant dense<0.000000e+00> : vector<4x256xf32>
    %100 = tpu.matmul %98, %99, %cst_99 {dimension_numbers = #tpu.dot_dimension_numbers<[1], [0], [0], [1], [0, 0, 1, 1], [], []>} : vector<4x8xf32>, vector<8x256xf32>, vector<4x256xf32> -> vector<4x256xf32>
    %c5_100 = arith.constant 5 : index
    %c0_101 = arith.constant 0 : index
    %c0_102 = arith.constant 0 : index
    %101 = vector.load %arg5[%c5_100, %c0_101, %c0_102] : memref<9x4x8xf32, #tpu.memory_space<vmem>>, vector<1x4x8xf32>
    %102 = vector.shape_cast %101 : vector<1x4x8xf32> to vector<4x8xf32>
    %c0_103 = arith.constant 0 : index
    %c129_104 = arith.constant 129 : index
    %103 = vector.load %arg8[%c0_103, %c129_104] : memref<8x512xf32, #tpu.memory_space<vmem>>, vector<8x256xf32>
    %cst_105 = arith.constant dense<0.000000e+00> : vector<4x256xf32>
    %104 = tpu.matmul %102, %103, %cst_105 {dimension_numbers = #tpu.dot_dimension_numbers<[1], [0], [0], [1], [0, 0, 1, 1], [], []>} : vector<4x8xf32>, vector<8x256xf32>, vector<4x256xf32> -> vector<4x256xf32>
    %105 = arith.addf %100, %104 : vector<4x256xf32>
    %c8_106 = arith.constant 8 : index
    %c0_107 = arith.constant 0 : index
    %c0_108 = arith.constant 0 : index
    %106 = vector.load %arg5[%c8_106, %c0_107, %c0_108] : memref<9x4x8xf32, #tpu.memory_space<vmem>>, vector<1x4x8xf32>
    %107 = vector.shape_cast %106 : vector<1x4x8xf32> to vector<4x8xf32>
    %c0_109 = arith.constant 0 : index
    %c145_110 = arith.constant 145 : index
    %108 = vector.load %arg8[%c0_109, %c145_110] : memref<8x512xf32, #tpu.memory_space<vmem>>, vector<8x256xf32>
    %cst_111 = arith.constant dense<0.000000e+00> : vector<4x256xf32>
    %109 = tpu.matmul %107, %108, %cst_111 {dimension_numbers = #tpu.dot_dimension_numbers<[1], [0], [0], [1], [0, 0, 1, 1], [], []>} : vector<4x8xf32>, vector<8x256xf32>, vector<4x256xf32> -> vector<4x256xf32>
    %110 = arith.addf %105, %109 : vector<4x256xf32>
    %111 = vector.broadcast %0 : vector<1x256xf32> to vector<4x256xf32>
    %112 = arith.mulf %82, %111 : vector<4x256xf32>
    %113 = arith.addf %96, %112 : vector<4x256xf32>
    %114 = vector.broadcast %1 : vector<1x256xf32> to vector<4x256xf32>
    %115 = arith.mulf %110, %114 : vector<4x256xf32>
    %116 = arith.addf %113, %115 : vector<4x256xf32>
    %c0_112 = arith.constant 0 : index
    %c0_113 = arith.constant 0 : index
    %117 = vector.load %arg6[%c0_112, %c0_113] : memref<4x1xf32, #tpu.memory_space<vmem>>, vector<4x1xf32>
    %118 = vector.broadcast %117 : vector<4x1xf32> to vector<4x256xf32>
    %119 = arith.addf %116, %118 : vector<4x256xf32>
    %c0_114 = arith.constant 0 : index
    %c0_115 = arith.constant 0 : index
    %c0_116 = arith.constant 0 : index
    %120 = vector.load %arg7[%c0_114, %c0_115, %c0_116] : memref<2x4x256xf32, #tpu.memory_space<vmem>>, vector<1x4x256xf32>
    %121 = vector.shape_cast %120 : vector<1x4x256xf32> to vector<4x256xf32>
    %122 = vector.shape_cast %119 : vector<4x256xf32> to vector<1x4x256xf32>
    tpu.vector_store %arg7[%c0_114, %c0_115, %c0_116], %122 {strides = array<i32>} : memref<2x4x256xf32, #tpu.memory_space<vmem>>, vector<1x4x256xf32>,
    %c0_117 = arith.constant 0 : index
    %c0_118 = arith.constant 0 : index
    %c0_119 = arith.constant 0 : index
    %123 = vector.load %arg3[%c0_117, %c0_118, %c0_119] : memref<9x8x4xf32, #tpu.memory_space<vmem>>, vector<1x8x4xf32>
    %124 = vector.shape_cast %123 : vector<1x8x4xf32> to vector<8x4xf32>
    %c1_120 = arith.constant 1 : index
    %c0_121 = arith.constant 0 : index
    %c111_122 = arith.constant 111 : index
    %125 = vector.load %arg1[%c1_120, %c0_121, %c111_122] : memref<2x4x512xf32, #tpu.memory_space<vmem>>, vector<1x4x256xf32>
    %126 = vector.shape_cast %125 : vector<1x4x256xf32> to vector<4x256xf32>
    %cst_123 = arith.constant dense<0.000000e+00> : vector<8x256xf32>
    %127 = tpu.matmul %124, %126, %cst_123 {dimension_numbers = #tpu.dot_dimension_numbers<[1], [0], [0], [1], [0, 0, 1, 1], [], []>} : vector<8x4xf32>, vector<4x256xf32>, vector<8x256xf32> -> vector<8x256xf32>
    %c3_124 = arith.constant 3 : index
    %c0_125 = arith.constant 0 : index
    %c0_126 = arith.constant 0 : index
    %128 = vector.load %arg3[%c3_124, %c0_125, %c0_126] : memref<9x8x4xf32, #tpu.memory_space<vmem>>, vector<1x8x4xf32>
    %129 = vector.shape_cast %128 : vector<1x8x4xf32> to vector<8x4xf32>
    %c1_127 = arith.constant 1 : index
    %c0_128 = arith.constant 0 : index
    %c127_129 = arith.constant 127 : index
    %130 = vector.load %arg1[%c1_127, %c0_128, %c127_129] : memref<2x4x512xf32, #tpu.memory_space<vmem>>, vector<1x4x256xf32>
    %131 = vector.shape_cast %130 : vector<1x4x256xf32> to vector<4x256xf32>
    %cst_130 = arith.constant dense<0.000000e+00> : vector<8x256xf32>
    %132 = tpu.matmul %129, %131, %cst_130 {dimension_numbers = #tpu.dot_dimension_numbers<[1], [0], [0], [1], [0, 0, 1, 1], [], []>} : vector<8x4xf32>, vector<4x256xf32>, vector<8x256xf32> -> vector<8x256xf32>
    %133 = arith.addf %127, %132 : vector<8x256xf32>
    %c6_131 = arith.constant 6 : index
    %c0_132 = arith.constant 0 : index
    %c0_133 = arith.constant 0 : index
    %134 = vector.load %arg3[%c6_131, %c0_132, %c0_133] : memref<9x8x4xf32, #tpu.memory_space<vmem>>, vector<1x8x4xf32>
    %135 = vector.shape_cast %134 : vector<1x8x4xf32> to vector<8x4xf32>
    %c1_134 = arith.constant 1 : index
    %c0_135 = arith.constant 0 : index
    %c143_136 = arith.constant 143 : index
    %136 = vector.load %arg1[%c1_134, %c0_135, %c143_136] : memref<2x4x512xf32, #tpu.memory_space<vmem>>, vector<1x4x256xf32>
    %137 = vector.shape_cast %136 : vector<1x4x256xf32> to vector<4x256xf32>
    %cst_137 = arith.constant dense<0.000000e+00> : vector<8x256xf32>
    %138 = tpu.matmul %135, %137, %cst_137 {dimension_numbers = #tpu.dot_dimension_numbers<[1], [0], [0], [1], [0, 0, 1, 1], [], []>} : vector<8x4xf32>, vector<4x256xf32>, vector<8x256xf32> -> vector<8x256xf32>
    %139 = arith.addf %133, %138 : vector<8x256xf32>
    %c1_138 = arith.constant 1 : index
    %c0_139 = arith.constant 0 : index
    %c0_140 = arith.constant 0 : index
    %140 = vector.load %arg3[%c1_138, %c0_139, %c0_140] : memref<9x8x4xf32, #tpu.memory_space<vmem>>, vector<1x8x4xf32>
    %141 = vector.shape_cast %140 : vector<1x8x4xf32> to vector<8x4xf32>
    %c1_141 = arith.constant 1 : index
    %c0_142 = arith.constant 0 : index
    %c112_143 = arith.constant 112 : index
    %142 = vector.load %arg1[%c1_141, %c0_142, %c112_143] : memref<2x4x512xf32, #tpu.memory_space<vmem>>, vector<1x4x256xf32>
    %143 = vector.shape_cast %142 : vector<1x4x256xf32> to vector<4x256xf32>
    %cst_144 = arith.constant dense<0.000000e+00> : vector<8x256xf32>
    %144 = tpu.matmul %141, %143, %cst_144 {dimension_numbers = #tpu.dot_dimension_numbers<[1], [0], [0], [1], [0, 0, 1, 1], [], []>} : vector<8x4xf32>, vector<4x256xf32>, vector<8x256xf32> -> vector<8x256xf32>
    %c4_145 = arith.constant 4 : index
    %c0_146 = arith.constant 0 : index
    %c0_147 = arith.constant 0 : index
    %145 = vector.load %arg3[%c4_145, %c0_146, %c0_147] : memref<9x8x4xf32, #tpu.memory_space<vmem>>, vector<1x8x4xf32>
    %146 = vector.shape_cast %145 : vector<1x8x4xf32> to vector<8x4xf32>
    %c1_148 = arith.constant 1 : index
    %c0_149 = arith.constant 0 : index
    %c128_150 = arith.constant 128 : index
    %147 = vector.load %arg1[%c1_148, %c0_149, %c128_150] : memref<2x4x512xf32, #tpu.memory_space<vmem>>, vector<1x4x256xf32>
    %148 = vector.shape_cast %147 : vector<1x4x256xf32> to vector<4x256xf32>
    %cst_151 = arith.constant dense<0.000000e+00> : vector<8x256xf32>
    %149 = tpu.matmul %146, %148, %cst_151 {dimension_numbers = #tpu.dot_dimension_numbers<[1], [0], [0], [1], [0, 0, 1, 1], [], []>} : vector<8x4xf32>, vector<4x256xf32>, vector<8x256xf32> -> vector<8x256xf32>
    %150 = arith.addf %144, %149 : vector<8x256xf32>
    %c7_152 = arith.constant 7 : index
    %c0_153 = arith.constant 0 : index
    %c0_154 = arith.constant 0 : index
    %151 = vector.load %arg3[%c7_152, %c0_153, %c0_154] : memref<9x8x4xf32, #tpu.memory_space<vmem>>, vector<1x8x4xf32>
    %152 = vector.shape_cast %151 : vector<1x8x4xf32> to vector<8x4xf32>
    %c1_155 = arith.constant 1 : index
    %c0_156 = arith.constant 0 : index
    %c144_157 = arith.constant 144 : index
    %153 = vector.load %arg1[%c1_155, %c0_156, %c144_157] : memref<2x4x512xf32, #tpu.memory_space<vmem>>, vector<1x4x256xf32>
    %154 = vector.shape_cast %153 : vector<1x4x256xf32> to vector<4x256xf32>
    %cst_158 = arith.constant dense<0.000000e+00> : vector<8x256xf32>
    %155 = tpu.matmul %152, %154, %cst_158 {dimension_numbers = #tpu.dot_dimension_numbers<[1], [0], [0], [1], [0, 0, 1, 1], [], []>} : vector<8x4xf32>, vector<4x256xf32>, vector<8x256xf32> -> vector<8x256xf32>
    %156 = arith.addf %150, %155 : vector<8x256xf32>
    %c2_159 = arith.constant 2 : index
    %c0_160 = arith.constant 0 : index
    %c0_161 = arith.constant 0 : index
    %157 = vector.load %arg3[%c2_159, %c0_160, %c0_161] : memref<9x8x4xf32, #tpu.memory_space<vmem>>, vector<1x8x4xf32>
    %158 = vector.shape_cast %157 : vector<1x8x4xf32> to vector<8x4xf32>
    %c1_162 = arith.constant 1 : index
    %c0_163 = arith.constant 0 : index
    %c113_164 = arith.constant 113 : index
    %159 = vector.load %arg1[%c1_162, %c0_163, %c113_164] : memref<2x4x512xf32, #tpu.memory_space<vmem>>, vector<1x4x256xf32>
    %160 = vector.shape_cast %159 : vector<1x4x256xf32> to vector<4x256xf32>
    %cst_165 = arith.constant dense<0.000000e+00> : vector<8x256xf32>
    %161 = tpu.matmul %158, %160, %cst_165 {dimension_numbers = #tpu.dot_dimension_numbers<[1], [0], [0], [1], [0, 0, 1, 1], [], []>} : vector<8x4xf32>, vector<4x256xf32>, vector<8x256xf32> -> vector<8x256xf32>
    %c5_166 = arith.constant 5 : index
    %c0_167 = arith.constant 0 : index
    %c0_168 = arith.constant 0 : index
    %162 = vector.load %arg3[%c5_166, %c0_167, %c0_168] : memref<9x8x4xf32, #tpu.memory_space<vmem>>, vector<1x8x4xf32>
    %163 = vector.shape_cast %162 : vector<1x8x4xf32> to vector<8x4xf32>
    %c1_169 = arith.constant 1 : index
    %c0_170 = arith.constant 0 : index
    %c129_171 = arith.constant 129 : index
    %164 = vector.load %arg1[%c1_169, %c0_170, %c129_171] : memref<2x4x512xf32, #tpu.memory_space<vmem>>, vector<1x4x256xf32>
    %165 = vector.shape_cast %164 : vector<1x4x256xf32> to vector<4x256xf32>
    %cst_172 = arith.constant dense<0.000000e+00> : vector<8x256xf32>
    %166 = tpu.matmul %163, %165, %cst_172 {dimension_numbers = #tpu.dot_dimension_numbers<[1], [0], [0], [1], [0, 0, 1, 1], [], []>} : vector<8x4xf32>, vector<4x256xf32>, vector<8x256xf32> -> vector<8x256xf32>
    %167 = arith.addf %161, %166 : vector<8x256xf32>
    %c8_173 = arith.constant 8 : index
    %c0_174 = arith.constant 0 : index
    %c0_175 = arith.constant 0 : index
    %168 = vector.load %arg3[%c8_173, %c0_174, %c0_175] : memref<9x8x4xf32, #tpu.memory_space<vmem>>, vector<1x8x4xf32>
    %169 = vector.shape_cast %168 : vector<1x8x4xf32> to vector<8x4xf32>
    %c1_176 = arith.constant 1 : index
    %c0_177 = arith.constant 0 : index
    %c145_178 = arith.constant 145 : index
    %170 = vector.load %arg1[%c1_176, %c0_177, %c145_178] : memref<2x4x512xf32, #tpu.memory_space<vmem>>, vector<1x4x256xf32>
    %171 = vector.shape_cast %170 : vector<1x4x256xf32> to vector<4x256xf32>
    %cst_179 = arith.constant dense<0.000000e+00> : vector<8x256xf32>
    %172 = tpu.matmul %169, %171, %cst_179 {dimension_numbers = #tpu.dot_dimension_numbers<[1], [0], [0], [1], [0, 0, 1, 1], [], []>} : vector<8x4xf32>, vector<4x256xf32>, vector<8x256xf32> -> vector<8x256xf32>
    %173 = arith.addf %167, %172 : vector<8x256xf32>
    %174 = vector.broadcast %0 : vector<1x256xf32> to vector<8x256xf32>
    %175 = arith.mulf %139, %174 : vector<8x256xf32>
    %176 = arith.addf %156, %175 : vector<8x256xf32>
    %177 = vector.broadcast %1 : vector<1x256xf32> to vector<8x256xf32>
    %178 = arith.mulf %173, %177 : vector<8x256xf32>
    %179 = arith.addf %176, %178 : vector<8x256xf32>
    %c0_180 = arith.constant 0 : index
    %c0_181 = arith.constant 0 : index
    %180 = vector.load %arg4[%c0_180, %c0_181] : memref<8x1xf32, #tpu.memory_space<vmem>>, vector<8x1xf32>
    %181 = vector.broadcast %180 : vector<8x1xf32> to vector<8x256xf32>
    %182 = arith.addf %179, %181 : vector<8x256xf32>
    %cst_182 = arith.constant 0.000000e+00 : f32
    %183 = vector.broadcast %cst_182 : f32 to vector<8x256xf32>
    %184 = arith.maximumf %182, %183 : vector<8x256xf32>
    %c0_183 = arith.constant 0 : index
    %c128_184 = arith.constant 128 : index
    %185 = vector.load %arg8[%c0_183, %c128_184] : memref<8x512xf32, #tpu.memory_space<vmem>>, vector<8x256xf32>
    tpu.vector_store %arg8[%c0_183, %c128_184], %184 {strides = array<i32>} : memref<8x512xf32, #tpu.memory_space<vmem>>, vector<8x256xf32>,
    %c0_185 = arith.constant 0 : index
    %c0_186 = arith.constant 0 : index
    %c0_187 = arith.constant 0 : index
    %186 = vector.load %arg5[%c0_185, %c0_186, %c0_187] : memref<9x4x8xf32, #tpu.memory_space<vmem>>, vector<1x4x8xf32>
    %187 = vector.shape_cast %186 : vector<1x4x8xf32> to vector<4x8xf32>
    %c0_188 = arith.constant 0 : index
    %c111_189 = arith.constant 111 : index
    %188 = vector.load %arg8[%c0_188, %c111_189] : memref<8x512xf32, #tpu.memory_space<vmem>>, vector<8x256xf32>
    %cst_190 = arith.constant dense<0.000000e+00> : vector<4x256xf32>
    %189 = tpu.matmul %187, %188, %cst_190 {dimension_numbers = #tpu.dot_dimension_numbers<[1], [0], [0], [1], [0, 0, 1, 1], [], []>} : vector<4x8xf32>, vector<8x256xf32>, vector<4x256xf32> -> vector<4x256xf32>
    %c3_191 = arith.constant 3 : index
    %c0_192 = arith.constant 0 : index
    %c0_193 = arith.constant 0 : index
    %190 = vector.load %arg5[%c3_191, %c0_192, %c0_193] : memref<9x4x8xf32, #tpu.memory_space<vmem>>, vector<1x4x8xf32>
    %191 = vector.shape_cast %190 : vector<1x4x8xf32> to vector<4x8xf32>
    %c0_194 = arith.constant 0 : index
    %c127_195 = arith.constant 127 : index
    %192 = vector.load %arg8[%c0_194, %c127_195] : memref<8x512xf32, #tpu.memory_space<vmem>>, vector<8x256xf32>
    %cst_196 = arith.constant dense<0.000000e+00> : vector<4x256xf32>
    %193 = tpu.matmul %191, %192, %cst_196 {dimension_numbers = #tpu.dot_dimension_numbers<[1], [0], [0], [1], [0, 0, 1, 1], [], []>} : vector<4x8xf32>, vector<8x256xf32>, vector<4x256xf32> -> vector<4x256xf32>
    %194 = arith.addf %189, %193 : vector<4x256xf32>
    %c6_197 = arith.constant 6 : index
    %c0_198 = arith.constant 0 : index
    %c0_199 = arith.constant 0 : index
    %195 = vector.load %arg5[%c6_197, %c0_198, %c0_199] : memref<9x4x8xf32, #tpu.memory_space<vmem>>, vector<1x4x8xf32>
    %196 = vector.shape_cast %195 : vector<1x4x8xf32> to vector<4x8xf32>
    %c0_200 = arith.constant 0 : index
    %c143_201 = arith.constant 143 : index
    %197 = vector.load %arg8[%c0_200, %c143_201] : memref<8x512xf32, #tpu.memory_space<vmem>>, vector<8x256xf32>
    %cst_202 = arith.constant dense<0.000000e+00> : vector<4x256xf32>
    %198 = tpu.matmul %196, %197, %cst_202 {dimension_numbers = #tpu.dot_dimension_numbers<[1], [0], [0], [1], [0, 0, 1, 1], [], []>} : vector<4x8xf32>, vector<8x256xf32>, vector<4x256xf32> -> vector<4x256xf32>
    %199 = arith.addf %194, %198 : vector<4x256xf32>
    %c1_203 = arith.constant 1 : index
    %c0_204 = arith.constant 0 : index
    %c0_205 = arith.constant 0 : index
    %200 = vector.load %arg5[%c1_203, %c0_204, %c0_205] : memref<9x4x8xf32, #tpu.memory_space<vmem>>, vector<1x4x8xf32>
    %201 = vector.shape_cast %200 : vector<1x4x8xf32> to vector<4x8xf32>
    %c0_206 = arith.constant 0 : index
    %c112_207 = arith.constant 112 : index
    %202 = vector.load %arg8[%c0_206, %c112_207] : memref<8x512xf32, #tpu.memory_space<vmem>>, vector<8x256xf32>
    %cst_208 = arith.constant dense<0.000000e+00> : vector<4x256xf32>
    %203 = tpu.matmul %201, %202, %cst_208 {dimension_numbers = #tpu.dot_dimension_numbers<[1], [0], [0], [1], [0, 0, 1, 1], [], []>} : vector<4x8xf32>, vector<8x256xf32>, vector<4x256xf32> -> vector<4x256xf32>
    %c4_209 = arith.constant 4 : index
    %c0_210 = arith.constant 0 : index
    %c0_211 = arith.constant 0 : index
    %204 = vector.load %arg5[%c4_209, %c0_210, %c0_211] : memref<9x4x8xf32, #tpu.memory_space<vmem>>, vector<1x4x8xf32>
    %205 = vector.shape_cast %204 : vector<1x4x8xf32> to vector<4x8xf32>
    %c0_212 = arith.constant 0 : index
    %c128_213 = arith.constant 128 : index
    %206 = vector.load %arg8[%c0_212, %c128_213] : memref<8x512xf32, #tpu.memory_space<vmem>>, vector<8x256xf32>
    %cst_214 = arith.constant dense<0.000000e+00> : vector<4x256xf32>
    %207 = tpu.matmul %205, %206, %cst_214 {dimension_numbers = #tpu.dot_dimension_numbers<[1], [0], [0], [1], [0, 0, 1, 1], [], []>} : vector<4x8xf32>, vector<8x256xf32>, vector<4x256xf32> -> vector<4x256xf32>
    %208 = arith.addf %203, %207 : vector<4x256xf32>
    %c7_215 = arith.constant 7 : index
    %c0_216 = arith.constant 0 : index
    %c0_217 = arith.constant 0 : index
    %209 = vector.load %arg5[%c7_215, %c0_216, %c0_217] : memref<9x4x8xf32, #tpu.memory_space<vmem>>, vector<1x4x8xf32>
    %210 = vector.shape_cast %209 : vector<1x4x8xf32> to vector<4x8xf32>
    %c0_218 = arith.constant 0 : index
    %c144_219 = arith.constant 144 : index
    %211 = vector.load %arg8[%c0_218, %c144_219] : memref<8x512xf32, #tpu.memory_space<vmem>>, vector<8x256xf32>
    %cst_220 = arith.constant dense<0.000000e+00> : vector<4x256xf32>
    %212 = tpu.matmul %210, %211, %cst_220 {dimension_numbers = #tpu.dot_dimension_numbers<[1], [0], [0], [1], [0, 0, 1, 1], [], []>} : vector<4x8xf32>, vector<8x256xf32>, vector<4x256xf32> -> vector<4x256xf32>
    %213 = arith.addf %208, %212 : vector<4x256xf32>
    %c2_221 = arith.constant 2 : index
    %c0_222 = arith.constant 0 : index
    %c0_223 = arith.constant 0 : index
    %214 = vector.load %arg5[%c2_221, %c0_222, %c0_223] : memref<9x4x8xf32, #tpu.memory_space<vmem>>, vector<1x4x8xf32>
    %215 = vector.shape_cast %214 : vector<1x4x8xf32> to vector<4x8xf32>
    %c0_224 = arith.constant 0 : index
    %c113_225 = arith.constant 113 : index
    %216 = vector.load %arg8[%c0_224, %c113_225] : memref<8x512xf32, #tpu.memory_space<vmem>>, vector<8x256xf32>
    %cst_226 = arith.constant dense<0.000000e+00> : vector<4x256xf32>
    %217 = tpu.matmul %215, %216, %cst_226 {dimension_numbers = #tpu.dot_dimension_numbers<[1], [0], [0], [1], [0, 0, 1, 1], [], []>} : vector<4x8xf32>, vector<8x256xf32>, vector<4x256xf32> -> vector<4x256xf32>
    %c5_227 = arith.constant 5 : index
    %c0_228 = arith.constant 0 : index
    %c0_229 = arith.constant 0 : index
    %218 = vector.load %arg5[%c5_227, %c0_228, %c0_229] : memref<9x4x8xf32, #tpu.memory_space<vmem>>, vector<1x4x8xf32>
    %219 = vector.shape_cast %218 : vector<1x4x8xf32> to vector<4x8xf32>
    %c0_230 = arith.constant 0 : index
    %c129_231 = arith.constant 129 : index
    %220 = vector.load %arg8[%c0_230, %c129_231] : memref<8x512xf32, #tpu.memory_space<vmem>>, vector<8x256xf32>
    %cst_232 = arith.constant dense<0.000000e+00> : vector<4x256xf32>
    %221 = tpu.matmul %219, %220, %cst_232 {dimension_numbers = #tpu.dot_dimension_numbers<[1], [0], [0], [1], [0, 0, 1, 1], [], []>} : vector<4x8xf32>, vector<8x256xf32>, vector<4x256xf32> -> vector<4x256xf32>
    %222 = arith.addf %217, %221 : vector<4x256xf32>
    %c8_233 = arith.constant 8 : index
    %c0_234 = arith.constant 0 : index
    %c0_235 = arith.constant 0 : index
    %223 = vector.load %arg5[%c8_233, %c0_234, %c0_235] : memref<9x4x8xf32, #tpu.memory_space<vmem>>, vector<1x4x8xf32>
    %224 = vector.shape_cast %223 : vector<1x4x8xf32> to vector<4x8xf32>
    %c0_236 = arith.constant 0 : index
    %c145_237 = arith.constant 145 : index
    %225 = vector.load %arg8[%c0_236, %c145_237] : memref<8x512xf32, #tpu.memory_space<vmem>>, vector<8x256xf32>
    %cst_238 = arith.constant dense<0.000000e+00> : vector<4x256xf32>
    %226 = tpu.matmul %224, %225, %cst_238 {dimension_numbers = #tpu.dot_dimension_numbers<[1], [0], [0], [1], [0, 0, 1, 1], [], []>} : vector<4x8xf32>, vector<8x256xf32>, vector<4x256xf32> -> vector<4x256xf32>
    %227 = arith.addf %222, %226 : vector<4x256xf32>
    %228 = vector.broadcast %0 : vector<1x256xf32> to vector<4x256xf32>
    %229 = arith.mulf %199, %228 : vector<4x256xf32>
    %230 = arith.addf %213, %229 : vector<4x256xf32>
    %231 = vector.broadcast %1 : vector<1x256xf32> to vector<4x256xf32>
    %232 = arith.mulf %227, %231 : vector<4x256xf32>
    %233 = arith.addf %230, %232 : vector<4x256xf32>
    %c0_239 = arith.constant 0 : index
    %c0_240 = arith.constant 0 : index
    %234 = vector.load %arg6[%c0_239, %c0_240] : memref<4x1xf32, #tpu.memory_space<vmem>>, vector<4x1xf32>
    %235 = vector.broadcast %234 : vector<4x1xf32> to vector<4x256xf32>
    %236 = arith.addf %233, %235 : vector<4x256xf32>
    %c1_241 = arith.constant 1 : index
    %c0_242 = arith.constant 0 : index
    %c0_243 = arith.constant 0 : index
    %237 = vector.load %arg7[%c1_241, %c0_242, %c0_243] : memref<2x4x256xf32, #tpu.memory_space<vmem>>, vector<1x4x256xf32>
    %238 = vector.shape_cast %237 : vector<1x4x256xf32> to vector<4x256xf32>
    %239 = vector.shape_cast %236 : vector<4x256xf32> to vector<1x4x256xf32>
    tpu.vector_store %arg7[%c1_241, %c0_242, %c0_243], %239 {strides = array<i32>} : memref<2x4x256xf32, #tpu.memory_space<vmem>>, vector<1x4x256xf32>,
    return
  }
  func.func @transform_0(%arg0: i32) -> (i32, i32, i32) {
    %c0_i32 = arith.constant 0 : i32
    %c0_i32_0 = arith.constant 0 : i32
    %c0_i32_1 = arith.constant 0 : i32
    return %arg0, %c0_i32, %c0_i32_0 : i32, i32, i32
  }
  func.func @transform_1(%arg0: i32) -> (i32, i32) {
    %c0_i32 = arith.constant 0 : i32
    %c0_i32_0 = arith.constant 0 : i32
    %c0_i32_1 = arith.constant 0 : i32
    return %c0_i32, %c0_i32_0 : i32, i32
  }
  func.func @transform_2(%arg0: i32) -> (i32, i32, i32) {
    %c0_i32 = arith.constant 0 : i32
    %c0_i32_0 = arith.constant 0 : i32
    %c0_i32_1 = arith.constant 0 : i32
    %c0_i32_2 = arith.constant 0 : i32
    return %c0_i32, %c0_i32_0, %c0_i32_1 : i32, i32, i32
  }
  func.func @transform_3(%arg0: i32) -> (i32, i32) {
    %c0_i32 = arith.constant 0 : i32
    %c0_i32_0 = arith.constant 0 : i32
    %c0_i32_1 = arith.constant 0 : i32
    return %c0_i32, %c0_i32_0 : i32, i32
  }
  func.func @transform_4(%arg0: i32) -> (i32, i32, i32) {
    %c0_i32 = arith.constant 0 : i32
    %c0_i32_0 = arith.constant 0 : i32
    %c0_i32_1 = arith.constant 0 : i32
    %c0_i32_2 = arith.constant 0 : i32
    return %c0_i32, %c0_i32_0, %c0_i32_1 : i32, i32, i32
  }
  func.func @transform_5(%arg0: i32) -> (i32, i32) {
    %c0_i32 = arith.constant 0 : i32
    %c0_i32_0 = arith.constant 0 : i32
    %c0_i32_1 = arith.constant 0 : i32
    return %c0_i32, %c0_i32_0 : i32, i32
  }
  func.func @transform_6(%arg0: i32) -> (i32, i32, i32) {
    %c0_i32 = arith.constant 0 : i32
    %c0_i32_0 = arith.constant 0 : i32
    %c0_i32_1 = arith.constant 0 : i32
    return %arg0, %c0_i32, %c0_i32_0 : i32, i32, i32
  }
}

</mosaic_0001>

<llo_original>
// kernel: tpu_custom_call.1
$region0: #{tpu_custom_call.1}
  #allocation0 [shape = 'u32[]', space=smem, size = 0x4, offset = 0x4, fixed_abs, tag = 'smem constant byte address 0x4 - core index']
  #allocation1 [shape = 'u32[72,128]{1,0:T(1,128)}', space=vmem, size = 0x9000, scoped, tag = 'internal scratch']
  #allocation2 [shape = 'f32[8,512]{1,0:T(8,128)}', space=vmem, size = 0x4000, scoped, tag = 'scratch operand']
  %s0 = inlined_call_operand.vmem [shape: f32[2,4,512], index: 0, kind: input, shape index: {}]
  %s1 = inlined_call_operand.vmem [shape: f32[2,256], index: 1, kind: input, shape index: {}]
  %s2 = inlined_call_operand.vmem [shape: f32[9,8,4], index: 2, kind: input, shape index: {}]
  %s3 = inlined_call_operand.vmem [shape: f32[8,1], index: 3, kind: input, shape index: {}]
  %s4 = inlined_call_operand.vmem [shape: f32[9,4,8], index: 4, kind: input, shape index: {}]
  %s5 = inlined_call_operand.vmem [shape: f32[4,1], index: 5, kind: input, shape index: {}]
  %s6 = inlined_call_operand.hbm [shape: f32[2,4,256], index: 6, kind: output, shape index: {}]
  %s7 = sld [smem:[#allocation0]]
  $region34: #{tpu_custom_call.1} parent=0
    _
  %s9 = ssub.s32 1, %s7
  %s10 = scalar_select 0, %s9, %s7
  $region1: #{tpu_custom_call.1} parent=0
    #allocation3 [shape = 'u8[8192]{0}', space=vmem, size = 0x2000, scoped, tag = 'output window, operand 0, single buffered']
    #allocation4 [shape = 's32[1]{0}', space=sflag, size = 0x4, scoped, tag = 'scoped memory for tpu_custom_call.1']
    %11 = vsyncpa [#allocation4], 0
    // Predicated region
    $region2: #{tpu_custom_call.1} parent=1 // pred_check
      _
    $region3: #{tpu_custom_call.1} parent=1 // pred_check_branch
      %13 = sbr.rel (0) target = $region5
    $region4: #{tpu_custom_call.1} parent=1 // pred_region
      _
    $region5: #{tpu_custom_call.1} parent=1 // pred_fallthru
      _
    // Predicated region
    $region6: #{tpu_custom_call.1} parent=1 // pred_check
      _
    $region7: #{tpu_custom_call.1} parent=1 // pred_check_branch
      %15 = sbr.rel (0) target = $region9
    $region8: #{tpu_custom_call.1} parent=1 // pred_region
      _
    $region9: #{tpu_custom_call.1} parent=1 // pred_fallthru
      _
    // Predicated region
    $region10: #{tpu_custom_call.1} parent=1 // pred_check
      _
    $region11: #{tpu_custom_call.1} parent=1 // pred_check_branch
      %17 = sbr.rel (0) target = $region13
    $region12: #{tpu_custom_call.1} parent=1 // pred_region
      _
    $region13: #{tpu_custom_call.1} parent=1 // pred_fallthru
      _
    // Predicated region
    $region14: #{tpu_custom_call.1} parent=1 // pred_check
      _
    $region15: #{tpu_custom_call.1} parent=1 // pred_check_branch
      %19 = sbr.rel (0) target = $region17
    $region16: #{tpu_custom_call.1} parent=1 // pred_region
      _
    $region17: #{tpu_custom_call.1} parent=1 // pred_fallthru
      _
    // Predicated region
    $region18: #{tpu_custom_call.1} parent=1 // pred_check
      _
    $region19: #{tpu_custom_call.1} parent=1 // pred_check_branch
      %21 = sbr.rel (0) target = $region21
    $region20: #{tpu_custom_call.1} parent=1 // pred_region
      _
    $region21: #{tpu_custom_call.1} parent=1 // pred_fallthru
      _
    // Predicated region
    $region22: #{tpu_custom_call.1} parent=1 // pred_check
      _
    $region23: #{tpu_custom_call.1} parent=1 // pred_check_branch
      %23 = sbr.rel (0) target = $region25
    $region24: #{tpu_custom_call.1} parent=1 // pred_region
      _
    $region25: #{tpu_custom_call.1} parent=1 // pred_fallthru
      _
    %v24 = vld [vmem:[%s1] ss:$2 sm:$0x3]
    %s25 = scalar_lea.vmem %s1, 1
    %v26 = vld [vmem:[%s25] ss:$2 sm:$0x3]
    %27 = vst [vmem:[#allocation2] sm:$0xff] 0.0
    %28 = vst [vmem:[#allocation2 + $0x18] sm:$0xff] 0.0
    %v29 = vld [vmem:[%s2] sm:$0xff]
    %v30 = vld [vmem:[%s0] sm:$0xff]
    %v31 = vld [vmem:[%s0 + $0x8] sm:$0xf]
    %s32 = scalar_lea.vmem %s2, 24
    %v33 = vld [vmem:[%s32] sm:$0xff]
    %36 = vst [vmem:[#allocation1] ss:$2 sm:$0xff] %v30
    %s37 = scalar_lea.vmem [#allocation1], 16
    %38 = vst [vmem:[%s37] ss:$2 sm:$0xff] %v31
    %v39 = vld.sshfl [vmem:[#allocation1] sm:$0xff pattern:$0x75316420]
    %v40 = vld.sshfl [vmem:[#allocation1 + $0x8] sm:$0xff pattern:$0x75316420]
    %v41 = vld.sshfl [vmem:[#allocation1 + $0x10] sm:$0xff pattern:$0x75316420]
    %42 = vrot.lane.b32.xlu0 %v39, 1
    %v43 = vpop.permute.xlu0 %42
    %44 = vrot.lane.b32.xlu0 %v40, 1
    %v45 = vpop.permute.xlu0 %44
    %46 = vrot.lane.b32.xlu0 %v41, 1
    %v47 = vpop.permute.xlu0 %46
    %vm48 = vcmask 7168
    %v49 = vsel %vm48, %v43, %v45
    %v50 = vsel %vm48, %v45, %v47
    %vm51 = vcmask 31744
    %v53 = vsel %vm51, %v33, 0
    %vm55 = vcmask 1043456
    %v56 = vsel %vm55, %v49, 0
    %v58 = vsel %vm55, %v50, 0
    %60 = vmatpush.msra.mxu0 0.0
    %61 = vmatpush.msra.mxu0 0.0
    %62 = vmatpush.msra.mxu0 0.0
    %63 = vmatpush.msra.mxu0 0.0
    %64 = vmatpush.msra.mxu0 0.0
    %65 = vmatpush.msra.mxu0 0.0
    %66 = vmatpush.msra.mxu0 0.0
    %67 = vmatpush.msra.mxu0 0.0
    %68 = vmatpush.msra.mxu0 0.0
    %69 = vmatpush.msra.mxu0 0.0
    %70 = vmatpush.msra.mxu0 0.0
    %71 = vmatpush.msra.mxu0 0.0
    %72 = vmatpush.msra.mxu0 0.0
    %73 = vmatpush.msra.mxu0 0.0
    %74 = vmatpush.msra.mxu0 0.0
    %75 = vmatpush.msra.mxu0 %v56
    %76 = vmatmul.f32.gmra.mxu0 %v53
    %v77 = vpop.f32.mrf.mxu0
    %v78 = vadd.f32 0.0, %v77
    %79 = vdwg.mxu0
    %80 = vmatpush.msra.mxu0 0.0
    %81 = vmatpush.msra.mxu0 0.0
    %82 = vmatpush.msra.mxu0 0.0
    %83 = vmatpush.msra.mxu0 0.0
    %84 = vmatpush.msra.mxu0 0.0
    %85 = vmatpush.msra.mxu0 0.0
    %86 = vmatpush.msra.mxu0 0.0
    %87 = vmatpush.msra.mxu0 0.0
    %88 = vmatpush.msra.mxu0 0.0
    %89 = vmatpush.msra.mxu0 0.0
    %90 = vmatpush.msra.mxu0 0.0
    %91 = vmatpush.msra.mxu0 0.0
    %92 = vmatpush.msra.mxu0 0.0
    %93 = vmatpush.msra.mxu0 0.0
    %94 = vmatpush.msra.mxu0 0.0
    %95 = vmatpush.msra.mxu0 %v58
    %96 = vmatmul.f32.gmra.mxu0 %v53
    %v97 = vpop.f32.mrf.mxu0
    %v98 = vadd.f32 0.0, %v97
    %99 = vdwg.mxu0
    %100 = vst [vmem:[#allocation1] ss:$2 sm:$0xff] %v30
    %s101 = scalar_lea.vmem [#allocation1], 16
    %102 = vst [vmem:[%s101] ss:$2 sm:$0xff] %v31
    %v103 = vld.sshfl [vmem:[#allocation1] sm:$0xff pattern:$0x75316420]
    %v104 = vld.sshfl [vmem:[#allocation1 + $0x8] sm:$0xff pattern:$0x75316420]
    %v105 = vld.sshfl [vmem:[#allocation1 + $0x10] sm:$0xff pattern:$0x75316420]
    %106 = vrot.lane.b32.xlu0 %v103, 17
    %v107 = vpop.permute.xlu0 %106
    %108 = vrot.lane.b32.xlu0 %v104, 17
    %v109 = vpop.permute.xlu0 %108
    %110 = vrot.lane.b32.xlu0 %v105, 17
    %v111 = vpop.permute.xlu0 %110
    %vm112 = vcmask 138240
    %v113 = vsel %vm112, %v107, %v109
    %v114 = vsel %vm112, %v109, %v111
    %v116 = vsel %vm51, %v29, 0
    %v118 = vsel %vm55, %v113, 0
    %v120 = vsel %vm55, %v114, 0
    %122 = vmatpush.msra.mxu0 0.0
    %123 = vmatpush.msra.mxu0 0.0
    %124 = vmatpush.msra.mxu0 0.0
    %125 = vmatpush.msra.mxu0 0.0
    %126 = vmatpush.msra.mxu0 0.0
    %127 = vmatpush.msra.mxu0 0.0
    %128 = vmatpush.msra.mxu0 0.0
    %129 = vmatpush.msra.mxu0 0.0
    %130 = vmatpush.msra.mxu0 0.0
    %131 = vmatpush.msra.mxu0 0.0
    %132 = vmatpush.msra.mxu0 0.0
    %133 = vmatpush.msra.mxu0 0.0
    %134 = vmatpush.msra.mxu0 0.0
    %135 = vmatpush.msra.mxu0 0.0
    %136 = vmatpush.msra.mxu0 0.0
    %137 = vmatpush.msra.mxu0 %v118
    %138 = vmatmul.f32.gmra.mxu0 %v116
    %v139 = vpop.f32.mrf.mxu0
    %v140 = vadd.f32 %v78, %v139
    %141 = vdwg.mxu0
    %142 = vmatpush.msra.mxu0 0.0
    %143 = vmatpush.msra.mxu0 0.0
    %144 = vmatpush.msra.mxu0 0.0
    %145 = vmatpush.msra.mxu0 0.0
    %146 = vmatpush.msra.mxu0 0.0
    %147 = vmatpush.msra.mxu0 0.0
    %148 = vmatpush.msra.mxu0 0.0
    %149 = vmatpush.msra.mxu0 0.0
    %150 = vmatpush.msra.mxu0 0.0
    %151 = vmatpush.msra.mxu0 0.0
    %152 = vmatpush.msra.mxu0 0.0
    %153 = vmatpush.msra.mxu0 0.0
    %154 = vmatpush.msra.mxu0 0.0
    %155 = vmatpush.msra.mxu0 0.0
    %156 = vmatpush.msra.mxu0 0.0
    %157 = vmatpush.msra.mxu0 %v120
    %158 = vmatmul.f32.gmra.mxu0 %v116
    %v159 = vpop.f32.mrf.mxu0
    %v160 = vadd.f32 %v98, %v159
    %161 = vdwg.mxu0
    %s162 = scalar_lea.vmem %s2, 48
    %v163 = vld [vmem:[%s162] sm:$0xff]
    %v164 = vld [vmem:[%s0 + $0x4] sm:$0xff]
    %v165 = vld [vmem:[%s0 + $0xc] sm:$0xf]
    %168 = vst [vmem:[#allocation1] ss:$2 sm:$0xff] %v164
    %s169 = scalar_lea.vmem [#allocation1], 16
    %170 = vst [vmem:[%s169] ss:$2 sm:$0xff] %v165
    %v171 = vld.sshfl [vmem:[#allocation1] sm:$0xff pattern:$0x75316420]
    %v172 = vld.sshfl [vmem:[#allocation1 + $0x8] sm:$0xff pattern:$0x75316420]
    %v173 = vld.sshfl [vmem:[#allocation1 + $0x10] sm:$0xff pattern:$0x75316420]
    %174 = vrot.lane.b32.xlu0 %v171, 113
    %v175 = vpop.permute.xlu0 %174
    %176 = vrot.lane.b32.xlu0 %v172, 113
    %v177 = vpop.permute.xlu0 %176
    %178 = vrot.lane.b32.xlu0 %v173, 113
    %v179 = vpop.permute.xlu0 %178
    %vm180 = vcmask 924672
    %v181 = vsel %vm180, %v175, %v177
    %v182 = vsel %vm180, %v177, %v179
    %v184 = vsel %vm51, %v163, 0
    %v186 = vsel %vm55, %v181, 0
    %v188 = vsel %vm55, %v182, 0
    %190 = vmatpush.msra.mxu0 0.0
    %191 = vmatpush.msra.mxu0 0.0
    %192 = vmatpush.msra.mxu0 0.0
    %193 = vmatpush.msra.mxu0 0.0
    %194 = vmatpush.msra.mxu0 0.0
    %195 = vmatpush.msra.mxu0 0.0
    %196 = vmatpush.msra.mxu0 0.0
    %197 = vmatpush.msra.mxu0 0.0
    %198 = vmatpush.msra.mxu0 0.0
    %199 = vmatpush.msra.mxu0 0.0
    %200 = vmatpush.msra.mxu0 0.0
    %201 = vmatpush.msra.mxu0 0.0
    %202 = vmatpush.msra.mxu0 0.0
    %203 = vmatpush.msra.mxu0 0.0
    %204 = vmatpush.msra.mxu0 0.0
    %205 = vmatpush.msra.mxu0 %v186
    %206 = vmatmul.f32.gmra.mxu0 %v184
    %v207 = vpop.f32.mrf.mxu0
    %v208 = vadd.f32 0.0, %v207
    %209 = vdwg.mxu0
    %210 = vmatpush.msra.mxu0 0.0
    %211 = vmatpush.msra.mxu0 0.0
    %212 = vmatpush.msra.mxu0 0.0
    %213 = vmatpush.msra.mxu0 0.0
    %214 = vmatpush.msra.mxu0 0.0
    %215 = vmatpush.msra.mxu0 0.0
    %216 = vmatpush.msra.mxu0 0.0
    %217 = vmatpush.msra.mxu0 0.0
    %218 = vmatpush.msra.mxu0 0.0
    %219 = vmatpush.msra.mxu0 0.0
    %220 = vmatpush.msra.mxu0 0.0
    %221 = vmatpush.msra.mxu0 0.0
    %222 = vmatpush.msra.mxu0 0.0
    %223 = vmatpush.msra.mxu0 0.0
    %224 = vmatpush.msra.mxu0 0.0
    %225 = vmatpush.msra.mxu0 %v188
    %226 = vmatmul.f32.gmra.mxu0 %v184
    %v227 = vpop.f32.mrf.mxu0
    %v228 = vadd.f32 0.0, %v227
    %229 = vdwg.mxu0
    %v230 = vadd.f32 %v140, %v208
    %v231 = vadd.f32 %v160, %v228
    %s232 = scalar_lea.vmem %s2, 8
    %v233 = vld [vmem:[%s232] sm:$0xff]
    %v234 = vld [vmem:[%s0] sm:$0xff]
    %v235 = vld [vmem:[%s0 + $0x8] sm:$0xf]
    %s236 = scalar_lea.vmem %s2, 32
    %v237 = vld [vmem:[%s236] sm:$0xff]
    %v238 = vld [vmem:[%s0 + $0x4] sm:$0xff]
    %240 = vst [vmem:[#allocation1] ss:$2 sm:$0xff] %v238
    %v241 = vld.sshfl [vmem:[#allocation1] sm:$0xff pattern:$0x75316420]
    %v242 = vld.sshfl [vmem:[#allocation1 + $0x8] sm:$0xff pattern:$0x75316420]
    %v244 = vsel %vm51, %v237, 0
    %v246 = vsel %vm55, %v241, 0
    %v248 = vsel %vm55, %v242, 0
    %250 = vmatpush.msra.mxu0 0.0
    %251 = vmatpush.msra.mxu0 0.0
    %252 = vmatpush.msra.mxu0 0.0
    %253 = vmatpush.msra.mxu0 0.0
    %254 = vmatpush.msra.mxu0 0.0
    %255 = vmatpush.msra.mxu0 0.0
    %256 = vmatpush.msra.mxu0 0.0
    %257 = vmatpush.msra.mxu0 0.0
    %258 = vmatpush.msra.mxu0 0.0
    %259 = vmatpush.msra.mxu0 0.0
    %260 = vmatpush.msra.mxu0 0.0
    %261 = vmatpush.msra.mxu0 0.0
    %262 = vmatpush.msra.mxu0 0.0
    %263 = vmatpush.msra.mxu0 0.0
    %264 = vmatpush.msra.mxu0 0.0
    %265 = vmatpush.msra.mxu0 %v246
    %266 = vmatmul.f32.gmra.mxu0 %v244
    %v267 = vpop.f32.mrf.mxu0
    %v268 = vadd.f32 0.0, %v267
    %269 = vdwg.mxu0
    %270 = vmatpush.msra.mxu0 0.0
    %271 = vmatpush.msra.mxu0 0.0
    %272 = vmatpush.msra.mxu0 0.0
    %273 = vmatpush.msra.mxu0 0.0
    %274 = vmatpush.msra.mxu0 0.0
    %275 = vmatpush.msra.mxu0 0.0
    %276 = vmatpush.msra.mxu0 0.0
    %277 = vmatpush.msra.mxu0 0.0
    %278 = vmatpush.msra.mxu0 0.0
    %279 = vmatpush.msra.mxu0 0.0
    %280 = vmatpush.msra.mxu0 0.0
    %281 = vmatpush.msra.mxu0 0.0
    %282 = vmatpush.msra.mxu0 0.0
    %283 = vmatpush.msra.mxu0 0.0
    %284 = vmatpush.msra.mxu0 0.0
    %285 = vmatpush.msra.mxu0 %v248
    %286 = vmatmul.f32.gmra.mxu0 %v244
    %v287 = vpop.f32.mrf.mxu0
    %v288 = vadd.f32 0.0, %v287
    %289 = vdwg.mxu0
    %292 = vst [vmem:[#allocation1] ss:$2 sm:$0xff] %v234
    %s293 = scalar_lea.vmem [#allocation1], 16
    %294 = vst [vmem:[%s293] ss:$2 sm:$0xff] %v235
    %v295 = vld.sshfl [vmem:[#allocation1] sm:$0xff pattern:$0x75316420]
    %v296 = vld.sshfl [vmem:[#allocation1 + $0x8] sm:$0xff pattern:$0x75316420]
    %v297 = vld.sshfl [vmem:[#allocation1 + $0x10] sm:$0xff pattern:$0x75316420]
    %298 = vrot.lane.b32.xlu0 %v295, 16
    %v299 = vpop.permute.xlu0 %298
    %300 = vrot.lane.b32.xlu0 %v296, 16
    %v301 = vpop.permute.xlu0 %300
    %302 = vrot.lane.b32.xlu0 %v297, 16
    %v303 = vpop.permute.xlu0 %302
    %vm304 = vcmask 130048
    %v305 = vsel %vm304, %v299, %v301
    %v306 = vsel %vm304, %v301, %v303
    %v308 = vsel %vm51, %v233, 0
    %v310 = vsel %vm55, %v305, 0
    %v312 = vsel %vm55, %v306, 0
    %314 = vmatpush.msra.mxu0 0.0
    %315 = vmatpush.msra.mxu0 0.0
    %316 = vmatpush.msra.mxu0 0.0
    %317 = vmatpush.msra.mxu0 0.0
    %318 = vmatpush.msra.mxu0 0.0
    %319 = vmatpush.msra.mxu0 0.0
    %320 = vmatpush.msra.mxu0 0.0
    %321 = vmatpush.msra.mxu0 0.0
    %322 = vmatpush.msra.mxu0 0.0
    %323 = vmatpush.msra.mxu0 0.0
    %324 = vmatpush.msra.mxu0 0.0
    %325 = vmatpush.msra.mxu0 0.0
    %326 = vmatpush.msra.mxu0 0.0
    %327 = vmatpush.msra.mxu0 0.0
    %328 = vmatpush.msra.mxu0 0.0
    %329 = vmatpush.msra.mxu0 %v310
    %330 = vmatmul.f32.gmra.mxu0 %v308
    %v331 = vpop.f32.mrf.mxu0
    %v332 = vadd.f32 %v268, %v331
    %333 = vdwg.mxu0
    %334 = vmatpush.msra.mxu0 0.0
    %335 = vmatpush.msra.mxu0 0.0
    %336 = vmatpush.msra.mxu0 0.0
    %337 = vmatpush.msra.mxu0 0.0
    %338 = vmatpush.msra.mxu0 0.0
    %339 = vmatpush.msra.mxu0 0.0
    %340 = vmatpush.msra.mxu0 0.0
    %341 = vmatpush.msra.mxu0 0.0
    %342 = vmatpush.msra.mxu0 0.0
    %343 = vmatpush.msra.mxu0 0.0
    %344 = vmatpush.msra.mxu0 0.0
    %345 = vmatpush.msra.mxu0 0.0
    %346 = vmatpush.msra.mxu0 0.0
    %347 = vmatpush.msra.mxu0 0.0
    %348 = vmatpush.msra.mxu0 0.0
    %349 = vmatpush.msra.mxu0 %v312
    %350 = vmatmul.f32.gmra.mxu0 %v308
    %v351 = vpop.f32.mrf.mxu0
    %v352 = vadd.f32 %v288, %v351
    %353 = vdwg.mxu0
    %s354 = scalar_lea.vmem %s2, 56
    %v355 = vld [vmem:[%s354] sm:$0xff]
    %v356 = vld [vmem:[%s0 + $0x4] sm:$0xff]
    %v357 = vld [vmem:[%s0 + $0xc] sm:$0xf]
    %360 = vst [vmem:[#allocation1] ss:$2 sm:$0xff] %v356
    %s361 = scalar_lea.vmem [#allocation1], 16
    %362 = vst [vmem:[%s361] ss:$2 sm:$0xff] %v357
    %v363 = vld.sshfl [vmem:[#allocation1] sm:$0xff pattern:$0x75316420]
    %v364 = vld.sshfl [vmem:[#allocation1 + $0x8] sm:$0xff pattern:$0x75316420]
    %v365 = vld.sshfl [vmem:[#allocation1 + $0x10] sm:$0xff pattern:$0x75316420]
    %366 = vrot.lane.b32.xlu0 %v363, 112
    %v367 = vpop.permute.xlu0 %366
    %368 = vrot.lane.b32.xlu0 %v364, 112
    %v369 = vpop.permute.xlu0 %368
    %370 = vrot.lane.b32.xlu0 %v365, 112
    %v371 = vpop.permute.xlu0 %370
    %vm372 = vcmask 916480
    %v373 = vsel %vm372, %v367, %v369
    %v374 = vsel %vm372, %v369, %v371
    %v376 = vsel %vm51, %v355, 0
    %v378 = vsel %vm55, %v373, 0
    %v380 = vsel %vm55, %v374, 0
    %382 = vmatpush.msra.mxu0 0.0
    %383 = vmatpush.msra.mxu0 0.0
    %384 = vmatpush.msra.mxu0 0.0
    %385 = vmatpush.msra.mxu0 0.0
    %386 = vmatpush.msra.mxu0 0.0
    %387 = vmatpush.msra.mxu0 0.0
    %388 = vmatpush.msra.mxu0 0.0
    %389 = vmatpush.msra.mxu0 0.0
    %390 = vmatpush.msra.mxu0 0.0
    %391 = vmatpush.msra.mxu0 0.0
    %392 = vmatpush.msra.mxu0 0.0
    %393 = vmatpush.msra.mxu0 0.0
    %394 = vmatpush.msra.mxu0 0.0
    %395 = vmatpush.msra.mxu0 0.0
    %396 = vmatpush.msra.mxu0 0.0
    %397 = vmatpush.msra.mxu0 %v378
    %398 = vmatmul.f32.gmra.mxu0 %v376
    %v399 = vpop.f32.mrf.mxu0
    %v400 = vadd.f32 0.0, %v399
    %401 = vdwg.mxu0
    %402 = vmatpush.msra.mxu0 0.0
    %403 = vmatpush.msra.mxu0 0.0
    %404 = vmatpush.msra.mxu0 0.0
    %405 = vmatpush.msra.mxu0 0.0
    %406 = vmatpush.msra.mxu0 0.0
    %407 = vmatpush.msra.mxu0 0.0
    %408 = vmatpush.msra.mxu0 0.0
    %409 = vmatpush.msra.mxu0 0.0
    %410 = vmatpush.msra.mxu0 0.0
    %411 = vmatpush.msra.mxu0 0.0
    %412 = vmatpush.msra.mxu0 0.0
    %413 = vmatpush.msra.mxu0 0.0
    %414 = vmatpush.msra.mxu0 0.0
    %415 = vmatpush.msra.mxu0 0.0
    %416 = vmatpush.msra.mxu0 0.0
    %417 = vmatpush.msra.mxu0 %v380
    %418 = vmatmul.f32.gmra.mxu0 %v376
    %v419 = vpop.f32.mrf.mxu0
    %v420 = vadd.f32 0.0, %v419
    %421 = vdwg.mxu0
    %v422 = vadd.f32 %v332, %v400
    %v423 = vadd.f32 %v352, %v420
    %s424 = scalar_lea.vmem %s2, 16
    %v425 = vld [vmem:[%s424] sm:$0xff]
    %v426 = vld [vmem:[%s0] sm:$0xff]
    %v427 = vld [vmem:[%s0 + $0x8] sm:$0xf]
    %s428 = scalar_lea.vmem %s2, 40
    %v429 = vld [vmem:[%s428] sm:$0xff]
    %v430 = vld [vmem:[%s0 + $0x4] sm:$0xff]
    %v431 = vld [vmem:[%s0 + $0xc] sm:$0xf]
    %434 = vst [vmem:[#allocation1] ss:$2 sm:$0xff] %v430
    %s435 = scalar_lea.vmem [#allocation1], 16
    %436 = vst [vmem:[%s435] ss:$2 sm:$0xff] %v431
    %v437 = vld.sshfl [vmem:[#allocation1] sm:$0xff pattern:$0x75316420]
    %v438 = vld.sshfl [vmem:[#allocation1 + $0x8] sm:$0xff pattern:$0x75316420]
    %v439 = vld.sshfl [vmem:[#allocation1 + $0x10] sm:$0xff pattern:$0x75316420]
    %440 = vrot.lane.b32.xlu0 %v437, 127
    %v441 = vpop.permute.xlu0 %440
    %442 = vrot.lane.b32.xlu0 %v438, 127
    %v443 = vpop.permute.xlu0 %442
    %444 = vrot.lane.b32.xlu0 %v439, 127
    %v445 = vpop.permute.xlu0 %444
    %vm446 = vcmask 1039360
    %v447 = vsel %vm446, %v441, %v443
    %v448 = vsel %vm446, %v443, %v445
    %v450 = vsel %vm51, %v429, 0
    %v452 = vsel %vm55, %v447, 0
    %v454 = vsel %vm55, %v448, 0
    %456 = vmatpush.msra.mxu0 0.0
    %457 = vmatpush.msra.mxu0 0.0
    %458 = vmatpush.msra.mxu0 0.0
    %459 = vmatpush.msra.mxu0 0.0
    %460 = vmatpush.msra.mxu0 0.0
    %461 = vmatpush.msra.mxu0 0.0
    %462 = vmatpush.msra.mxu0 0.0
    %463 = vmatpush.msra.mxu0 0.0
    %464 = vmatpush.msra.mxu0 0.0
    %465 = vmatpush.msra.mxu0 0.0
    %466 = vmatpush.msra.mxu0 0.0
    %467 = vmatpush.msra.mxu0 0.0
    %468 = vmatpush.msra.mxu0 0.0
    %469 = vmatpush.msra.mxu0 0.0
    %470 = vmatpush.msra.mxu0 0.0
    %471 = vmatpush.msra.mxu0 %v452
    %472 = vmatmul.f32.gmra.mxu0 %v450
    %v473 = vpop.f32.mrf.mxu0
    %v474 = vadd.f32 0.0, %v473
    %475 = vdwg.mxu0
    %476 = vmatpush.msra.mxu0 0.0
    %477 = vmatpush.msra.mxu0 0.0
    %478 = vmatpush.msra.mxu0 0.0
    %479 = vmatpush.msra.mxu0 0.0
    %480 = vmatpush.msra.mxu0 0.0
    %481 = vmatpush.msra.mxu0 0.0
    %482 = vmatpush.msra.mxu0 0.0
    %483 = vmatpush.msra.mxu0 0.0
    %484 = vmatpush.msra.mxu0 0.0
    %485 = vmatpush.msra.mxu0 0.0
    %486 = vmatpush.msra.mxu0 0.0
    %487 = vmatpush.msra.mxu0 0.0
    %488 = vmatpush.msra.mxu0 0.0
    %489 = vmatpush.msra.mxu0 0.0
    %490 = vmatpush.msra.mxu0 0.0
    %491 = vmatpush.msra.mxu0 %v454
    %492 = vmatmul.f32.gmra.mxu0 %v450
    %v493 = vpop.f32.mrf.mxu0
    %v494 = vadd.f32 0.0, %v493
    %495 = vdwg.mxu0
    %498 = vst [vmem:[#allocation1] ss:$2 sm:$0xff] %v426
    %s499 = scalar_lea.vmem [#allocation1], 16
    %500 = vst [vmem:[%s499] ss:$2 sm:$0xff] %v427
    %v501 = vld.sshfl [vmem:[#allocation1] sm:$0xff pattern:$0x75316420]
    %v502 = vld.sshfl [vmem:[#allocation1 + $0x8] sm:$0xff pattern:$0x75316420]
    %v503 = vld.sshfl [vmem:[#allocation1 + $0x10] sm:$0xff pattern:$0x75316420]
    %504 = vrot.lane.b32.xlu0 %v501, 15
    %v505 = vpop.permute.xlu0 %504
    %506 = vrot.lane.b32.xlu0 %v502, 15
    %v507 = vpop.permute.xlu0 %506
    %508 = vrot.lane.b32.xlu0 %v503, 15
    %v509 = vpop.permute.xlu0 %508
    %vm510 = vcmask 121856
    %v511 = vsel %vm510, %v505, %v507
    %v512 = vsel %vm510, %v507, %v509
    %v514 = vsel %vm51, %v425, 0
    %v516 = vsel %vm55, %v511, 0
    %v518 = vsel %vm55, %v512, 0
    %520 = vmatpush.msra.mxu0 0.0
    %521 = vmatpush.msra.mxu0 0.0
    %522 = vmatpush.msra.mxu0 0.0
    %523 = vmatpush.msra.mxu0 0.0
    %524 = vmatpush.msra.mxu0 0.0
    %525 = vmatpush.msra.mxu0 0.0
    %526 = vmatpush.msra.mxu0 0.0
    %527 = vmatpush.msra.mxu0 0.0
    %528 = vmatpush.msra.mxu0 0.0
    %529 = vmatpush.msra.mxu0 0.0
    %530 = vmatpush.msra.mxu0 0.0
    %531 = vmatpush.msra.mxu0 0.0
    %532 = vmatpush.msra.mxu0 0.0
    %533 = vmatpush.msra.mxu0 0.0
    %534 = vmatpush.msra.mxu0 0.0
    %535 = vmatpush.msra.mxu0 %v516
    %536 = vmatmul.f32.gmra.mxu0 %v514
    %v537 = vpop.f32.mrf.mxu0
    %v538 = vadd.f32 %v474, %v537
    %539 = vdwg.mxu0
    %540 = vmatpush.msra.mxu0 0.0
    %541 = vmatpush.msra.mxu0 0.0
    %542 = vmatpush.msra.mxu0 0.0
    %543 = vmatpush.msra.mxu0 0.0
    %544 = vmatpush.msra.mxu0 0.0
    %545 = vmatpush.msra.mxu0 0.0
    %546 = vmatpush.msra.mxu0 0.0
    %547 = vmatpush.msra.mxu0 0.0
    %548 = vmatpush.msra.mxu0 0.0
    %549 = vmatpush.msra.mxu0 0.0
    %550 = vmatpush.msra.mxu0 0.0
    %551 = vmatpush.msra.mxu0 0.0
    %552 = vmatpush.msra.mxu0 0.0
    %553 = vmatpush.msra.mxu0 0.0
    %554 = vmatpush.msra.mxu0 0.0
    %555 = vmatpush.msra.mxu0 %v518
    %556 = vmatmul.f32.gmra.mxu0 %v514
    %v557 = vpop.f32.mrf.mxu0
    %v558 = vadd.f32 %v494, %v557
    %559 = vdwg.mxu0
    %s560 = scalar_lea.vmem %s2, 64
    %v561 = vld [vmem:[%s560] sm:$0xff]
    %v562 = vld [vmem:[%s0 + $0x4] sm:$0xff]
    %v563 = vld [vmem:[%s0 + $0xc] sm:$0xf]
    %566 = vst [vmem:[#allocation1] ss:$2 sm:$0xff] %v562
    %s567 = scalar_lea.vmem [#allocation1], 16
    %568 = vst [vmem:[%s567] ss:$2 sm:$0xff] %v563
    %v569 = vld.sshfl [vmem:[#allocation1] sm:$0xff pattern:$0x75316420]
    %v570 = vld.sshfl [vmem:[#allocation1 + $0x8] sm:$0xff pattern:$0x75316420]
    %v571 = vld.sshfl [vmem:[#allocation1 + $0x10] sm:$0xff pattern:$0x75316420]
    %572 = vrot.lane.b32.xlu0 %v569, 111
    %v573 = vpop.permute.xlu0 %572
    %574 = vrot.lane.b32.xlu0 %v570, 111
    %v575 = vpop.permute.xlu0 %574
    %576 = vrot.lane.b32.xlu0 %v571, 111
    %v577 = vpop.permute.xlu0 %576
    %vm578 = vcmask 908288
    %v579 = vsel %vm578, %v573, %v575
    %v580 = vsel %vm578, %v575, %v577
    %v582 = vsel %vm51, %v561, 0
    %v584 = vsel %vm55, %v579, 0
    %v586 = vsel %vm55, %v580, 0
    %588 = vmatpush.msra.mxu0 0.0
    %589 = vmatpush.msra.mxu0 0.0
    %590 = vmatpush.msra.mxu0 0.0
    %591 = vmatpush.msra.mxu0 0.0
    %592 = vmatpush.msra.mxu0 0.0
    %593 = vmatpush.msra.mxu0 0.0
    %594 = vmatpush.msra.mxu0 0.0
    %595 = vmatpush.msra.mxu0 0.0
    %596 = vmatpush.msra.mxu0 0.0
    %597 = vmatpush.msra.mxu0 0.0
    %598 = vmatpush.msra.mxu0 0.0
    %599 = vmatpush.msra.mxu0 0.0
    %600 = vmatpush.msra.mxu0 0.0
    %601 = vmatpush.msra.mxu0 0.0
    %602 = vmatpush.msra.mxu0 0.0
    %603 = vmatpush.msra.mxu0 %v584
    %604 = vmatmul.f32.gmra.mxu0 %v582
    %v605 = vpop.f32.mrf.mxu0
    %v606 = vadd.f32 0.0, %v605
    %607 = vdwg.mxu0
    %608 = vmatpush.msra.mxu0 0.0
    %609 = vmatpush.msra.mxu0 0.0
    %610 = vmatpush.msra.mxu0 0.0
    %611 = vmatpush.msra.mxu0 0.0
    %612 = vmatpush.msra.mxu0 0.0
    %613 = vmatpush.msra.mxu0 0.0
    %614 = vmatpush.msra.mxu0 0.0
    %615 = vmatpush.msra.mxu0 0.0
    %616 = vmatpush.msra.mxu0 0.0
    %617 = vmatpush.msra.mxu0 0.0
    %618 = vmatpush.msra.mxu0 0.0
    %619 = vmatpush.msra.mxu0 0.0
    %620 = vmatpush.msra.mxu0 0.0
    %621 = vmatpush.msra.mxu0 0.0
    %622 = vmatpush.msra.mxu0 0.0
    %623 = vmatpush.msra.mxu0 %v586
    %624 = vmatmul.f32.gmra.mxu0 %v582
    %v625 = vpop.f32.mrf.mxu0
    %v626 = vadd.f32 0.0, %v625
    %627 = vdwg.mxu0
    %v628 = vadd.f32 %v538, %v606
    %v629 = vadd.f32 %v558, %v626
    %v631 = vperm.slane %v24, 0
    %v632 = vperm.slane %v24, 1
    %v635 = vmul.f32 %v230, %v631
    %v636 = vmul.f32 %v231, %v632
    %v637 = vadd.f32 %v422, %v635
    %v638 = vadd.f32 %v423, %v636
    %v640 = vperm.slane %v26, 0
    %v641 = vperm.slane %v26, 1
    %v644 = vmul.f32 %v628, %v640
    %v645 = vmul.f32 %v629, %v641
    %v646 = vadd.f32 %v637, %v644
    %v647 = vadd.f32 %v638, %v645
    %v648 = vld [vmem:[%s3] sm:$0xff]
    %650 = vset.pattern.permute.xlu0 0
    %651 = vperm.xlu0 %650, %v648
    %v652 = vpop.permute.xlu0 %651
    %v654 = vadd.f32 %v646, %v652
    %v655 = vadd.f32 %v647, %v652
    %v656 = vmax.f32 %v654, 0.0
    %v657 = vmax.f32 %v655, 0.0
    %658 = vst [vmem:[#allocation2 + $0x8] sm:$0xff] %v656
    %659 = vst [vmem:[#allocation2 + $0x10] sm:$0xff] %v657
    %v660 = vld [vmem:[%s4] sm:$0xf]
    %v661 = vld [vmem:[#allocation2] sm:$0xff]
    %v662 = vld [vmem:[#allocation2 + $0x8] sm:$0xff]
    %v663 = vld [vmem:[#allocation2 + $0x10] sm:$0xff]
    %s664 = scalar_lea.vmem %s4, 12
    %v665 = vld [vmem:[%s664] sm:$0xf]
    %669 = vrot.lane.b32.xlu0 %v661, 1
    %v670 = vpop.permute.xlu0 %669
    %671 = vrot.lane.b32.xlu0 %v662, 1
    %v672 = vpop.permute.xlu0 %671
    %673 = vrot.lane.b32.xlu0 %v663, 1
    %v674 = vpop.permute.xlu0 %673
    %v675 = vsel %vm48, %v670, %v672
    %v676 = vsel %vm48, %v672, %v674
    %vm679 = vcmask 64512
    %v681 = vsel %vm679, %v665, 0
    %683 = vmatpush.msra.mxu0 0.0
    %684 = vmatpush.msra.mxu0 0.0
    %685 = vmatpush.msra.mxu0 0.0
    %686 = vmatpush.msra.mxu0 0.0
    %687 = vmatpush.msra.mxu0 0.0
    %688 = vmatpush.msra.mxu0 0.0
    %689 = vmatpush.msra.mxu0 0.0
    %690 = vmatpush.msra.mxu0 0.0
    %691 = vmatpush.msra.mxu0 0.0
    %692 = vmatpush.msra.mxu0 0.0
    %693 = vmatpush.msra.mxu0 0.0
    %694 = vmatpush.msra.mxu0 0.0
    %695 = vmatpush.msra.mxu0 0.0
    %696 = vmatpush.msra.mxu0 0.0
    %697 = vmatpush.msra.mxu0 0.0
    %698 = vmatpush.msra.mxu0 %v675
    %699 = vmatmul.f32.gmra.mxu0 %v681
    %v700 = vpop.f32.mrf.mxu0
    %v701 = vadd.f32 0.0, %v700
    %702 = vdwg.mxu0
    %703 = vmatpush.msra.mxu0 0.0
    %704 = vmatpush.msra.mxu0 0.0
    %705 = vmatpush.msra.mxu0 0.0
    %706 = vmatpush.msra.mxu0 0.0
    %707 = vmatpush.msra.mxu0 0.0
    %708 = vmatpush.msra.mxu0 0.0
    %709 = vmatpush.msra.mxu0 0.0
    %710 = vmatpush.msra.mxu0 0.0
    %711 = vmatpush.msra.mxu0 0.0
    %712 = vmatpush.msra.mxu0 0.0
    %713 = vmatpush.msra.mxu0 0.0
    %714 = vmatpush.msra.mxu0 0.0
    %715 = vmatpush.msra.mxu0 0.0
    %716 = vmatpush.msra.mxu0 0.0
    %717 = vmatpush.msra.mxu0 0.0
    %718 = vmatpush.msra.mxu0 %v676
    %719 = vmatmul.f32.gmra.mxu0 %v681
    %v720 = vpop.f32.mrf.mxu0
    %v721 = vadd.f32 0.0, %v720
    %722 = vdwg.mxu0
    %723 = vrot.lane.b32.xlu0 %v661, 17
    %v724 = vpop.permute.xlu0 %723
    %725 = vrot.lane.b32.xlu0 %v662, 17
    %v726 = vpop.permute.xlu0 %725
    %727 = vrot.lane.b32.xlu0 %v663, 17
    %v728 = vpop.permute.xlu0 %727
    %v729 = vsel %vm112, %v724, %v726
    %v730 = vsel %vm112, %v726, %v728
    %v734 = vsel %vm679, %v660, 0
    %736 = vmatpush.msra.mxu0 0.0
    %737 = vmatpush.msra.mxu0 0.0
    %738 = vmatpush.msra.mxu0 0.0
    %739 = vmatpush.msra.mxu0 0.0
    %740 = vmatpush.msra.mxu0 0.0
    %741 = vmatpush.msra.mxu0 0.0
    %742 = vmatpush.msra.mxu0 0.0
    %743 = vmatpush.msra.mxu0 0.0
    %744 = vmatpush.msra.mxu0 0.0
    %745 = vmatpush.msra.mxu0 0.0
    %746 = vmatpush.msra.mxu0 0.0
    %747 = vmatpush.msra.mxu0 0.0
    %748 = vmatpush.msra.mxu0 0.0
    %749 = vmatpush.msra.mxu0 0.0
    %750 = vmatpush.msra.mxu0 0.0
    %751 = vmatpush.msra.mxu0 %v729
    %752 = vmatmul.f32.gmra.mxu0 %v734
    %v753 = vpop.f32.mrf.mxu0
    %v754 = vadd.f32 %v701, %v753
    %755 = vdwg.mxu0
    %756 = vmatpush.msra.mxu0 0.0
    %757 = vmatpush.msra.mxu0 0.0
    %758 = vmatpush.msra.mxu0 0.0
    %759 = vmatpush.msra.mxu0 0.0
    %760 = vmatpush.msra.mxu0 0.0
    %761 = vmatpush.msra.mxu0 0.0
    %762 = vmatpush.msra.mxu0 0.0
    %763 = vmatpush.msra.mxu0 0.0
    %764 = vmatpush.msra.mxu0 0.0
    %765 = vmatpush.msra.mxu0 0.0
    %766 = vmatpush.msra.mxu0 0.0
    %767 = vmatpush.msra.mxu0 0.0
    %768 = vmatpush.msra.mxu0 0.0
    %769 = vmatpush.msra.mxu0 0.0
    %770 = vmatpush.msra.mxu0 0.0
    %771 = vmatpush.msra.mxu0 %v730
    %772 = vmatmul.f32.gmra.mxu0 %v734
    %v773 = vpop.f32.mrf.mxu0
    %v774 = vadd.f32 %v721, %v773
    %775 = vdwg.mxu0
    %s776 = scalar_lea.vmem %s4, 24
    %v777 = vld [vmem:[%s776] sm:$0xf]
    %v778 = vld [vmem:[#allocation2 + $0x8] sm:$0xff]
    %v779 = vld [vmem:[#allocation2 + $0x10] sm:$0xff]
    %v780 = vld [vmem:[#allocation2 + $0x18] sm:$0xff]
    %784 = vrot.lane.b32.xlu0 %v778, 113
    %v785 = vpop.permute.xlu0 %784
    %786 = vrot.lane.b32.xlu0 %v779, 113
    %v787 = vpop.permute.xlu0 %786
    %788 = vrot.lane.b32.xlu0 %v780, 113
    %v789 = vpop.permute.xlu0 %788
    %v790 = vsel %vm180, %v785, %v787
    %v791 = vsel %vm180, %v787, %v789
    %v795 = vsel %vm679, %v777, 0
    %797 = vmatpush.msra.mxu0 0.0
    %798 = vmatpush.msra.mxu0 0.0
    %799 = vmatpush.msra.mxu0 0.0
    %800 = vmatpush.msra.mxu0 0.0
    %801 = vmatpush.msra.mxu0 0.0
    %802 = vmatpush.msra.mxu0 0.0
    %803 = vmatpush.msra.mxu0 0.0
    %804 = vmatpush.msra.mxu0 0.0
    %805 = vmatpush.msra.mxu0 0.0
    %806 = vmatpush.msra.mxu0 0.0
    %807 = vmatpush.msra.mxu0 0.0
    %808 = vmatpush.msra.mxu0 0.0
    %809 = vmatpush.msra.mxu0 0.0
    %810 = vmatpush.msra.mxu0 0.0
    %811 = vmatpush.msra.mxu0 0.0
    %812 = vmatpush.msra.mxu0 %v790
    %813 = vmatmul.f32.gmra.mxu0 %v795
    %v814 = vpop.f32.mrf.mxu0
    %v815 = vadd.f32 0.0, %v814
    %816 = vdwg.mxu0
    %817 = vmatpush.msra.mxu0 0.0
    %818 = vmatpush.msra.mxu0 0.0
    %819 = vmatpush.msra.mxu0 0.0
    %820 = vmatpush.msra.mxu0 0.0
    %821 = vmatpush.msra.mxu0 0.0
    %822 = vmatpush.msra.mxu0 0.0
    %823 = vmatpush.msra.mxu0 0.0
    %824 = vmatpush.msra.mxu0 0.0
    %825 = vmatpush.msra.mxu0 0.0
    %826 = vmatpush.msra.mxu0 0.0
    %827 = vmatpush.msra.mxu0 0.0
    %828 = vmatpush.msra.mxu0 0.0
    %829 = vmatpush.msra.mxu0 0.0
    %830 = vmatpush.msra.mxu0 0.0
    %831 = vmatpush.msra.mxu0 0.0
    %832 = vmatpush.msra.mxu0 %v791
    %833 = vmatmul.f32.gmra.mxu0 %v795
    %v834 = vpop.f32.mrf.mxu0
    %v835 = vadd.f32 0.0, %v834
    %836 = vdwg.mxu0
    %v837 = vadd.f32 %v754, %v815
    %v838 = vadd.f32 %v774, %v835
    %s839 = scalar_lea.vmem %s4, 4
    %v840 = vld [vmem:[%s839] sm:$0xf]
    %s841 = scalar_lea.vmem %s4, 16
    %v842 = vld [vmem:[%s841] sm:$0xf]
    %v844 = vsel %vm679, %v842, 0
    %846 = vmatpush.msra.mxu0 0.0
    %847 = vmatpush.msra.mxu0 0.0
    %848 = vmatpush.msra.mxu0 0.0
    %849 = vmatpush.msra.mxu0 0.0
    %850 = vmatpush.msra.mxu0 0.0
    %851 = vmatpush.msra.mxu0 0.0
    %852 = vmatpush.msra.mxu0 0.0
    %853 = vmatpush.msra.mxu0 0.0
    %854 = vmatpush.msra.mxu0 0.0
    %855 = vmatpush.msra.mxu0 0.0
    %856 = vmatpush.msra.mxu0 0.0
    %857 = vmatpush.msra.mxu0 0.0
    %858 = vmatpush.msra.mxu0 0.0
    %859 = vmatpush.msra.mxu0 0.0
    %860 = vmatpush.msra.mxu0 0.0
    %861 = vmatpush.msra.mxu0 %v662
    %862 = vmatmul.f32.gmra.mxu0 %v844
    %v863 = vpop.f32.mrf.mxu0
    %v864 = vadd.f32 0.0, %v863
    %865 = vdwg.mxu0
    %866 = vmatpush.msra.mxu0 0.0
    %867 = vmatpush.msra.mxu0 0.0
    %868 = vmatpush.msra.mxu0 0.0
    %869 = vmatpush.msra.mxu0 0.0
    %870 = vmatpush.msra.mxu0 0.0
    %871 = vmatpush.msra.mxu0 0.0
    %872 = vmatpush.msra.mxu0 0.0
    %873 = vmatpush.msra.mxu0 0.0
    %874 = vmatpush.msra.mxu0 0.0
    %875 = vmatpush.msra.mxu0 0.0
    %876 = vmatpush.msra.mxu0 0.0
    %877 = vmatpush.msra.mxu0 0.0
    %878 = vmatpush.msra.mxu0 0.0
    %879 = vmatpush.msra.mxu0 0.0
    %880 = vmatpush.msra.mxu0 0.0
    %881 = vmatpush.msra.mxu0 %v663
    %882 = vmatmul.f32.gmra.mxu0 %v844
    %v883 = vpop.f32.mrf.mxu0
    %v884 = vadd.f32 0.0, %v883
    %885 = vdwg.mxu0
    %886 = vrot.lane.b32.xlu0 %v661, 16
    %v887 = vpop.permute.xlu0 %886
    %888 = vrot.lane.b32.xlu0 %v662, 16
    %v889 = vpop.permute.xlu0 %888
    %890 = vrot.lane.b32.xlu0 %v663, 16
    %v891 = vpop.permute.xlu0 %890
    %v892 = vsel %vm304, %v887, %v889
    %v893 = vsel %vm304, %v889, %v891
    %v897 = vsel %vm679, %v840, 0
    %899 = vmatpush.msra.mxu0 0.0
    %900 = vmatpush.msra.mxu0 0.0
    %901 = vmatpush.msra.mxu0 0.0
    %902 = vmatpush.msra.mxu0 0.0
    %903 = vmatpush.msra.mxu0 0.0
    %904 = vmatpush.msra.mxu0 0.0
    %905 = vmatpush.msra.mxu0 0.0
    %906 = vmatpush.msra.mxu0 0.0
    %907 = vmatpush.msra.mxu0 0.0
    %908 = vmatpush.msra.mxu0 0.0
    %909 = vmatpush.msra.mxu0 0.0
    %910 = vmatpush.msra.mxu0 0.0
    %911 = vmatpush.msra.mxu0 0.0
    %912 = vmatpush.msra.mxu0 0.0
    %913 = vmatpush.msra.mxu0 0.0
    %914 = vmatpush.msra.mxu0 %v892
    %915 = vmatmul.f32.gmra.mxu0 %v897
    %v916 = vpop.f32.mrf.mxu0
    %v917 = vadd.f32 %v864, %v916
    %918 = vdwg.mxu0
    %919 = vmatpush.msra.mxu0 0.0
    %920 = vmatpush.msra.mxu0 0.0
    %921 = vmatpush.msra.mxu0 0.0
    %922 = vmatpush.msra.mxu0 0.0
    %923 = vmatpush.msra.mxu0 0.0
    %924 = vmatpush.msra.mxu0 0.0
    %925 = vmatpush.msra.mxu0 0.0
    %926 = vmatpush.msra.mxu0 0.0
    %927 = vmatpush.msra.mxu0 0.0
    %928 = vmatpush.msra.mxu0 0.0
    %929 = vmatpush.msra.mxu0 0.0
    %930 = vmatpush.msra.mxu0 0.0
    %931 = vmatpush.msra.mxu0 0.0
    %932 = vmatpush.msra.mxu0 0.0
    %933 = vmatpush.msra.mxu0 0.0
    %934 = vmatpush.msra.mxu0 %v893
    %935 = vmatmul.f32.gmra.mxu0 %v897
    %v936 = vpop.f32.mrf.mxu0
    %v937 = vadd.f32 %v884, %v936
    %938 = vdwg.mxu0
    %s939 = scalar_lea.vmem %s4, 28
    %v940 = vld [vmem:[%s939] sm:$0xf]
    %941 = vrot.lane.b32.xlu0 %v778, 112
    %v942 = vpop.permute.xlu0 %941
    %943 = vrot.lane.b32.xlu0 %v779, 112
    %v944 = vpop.permute.xlu0 %943
    %945 = vrot.lane.b32.xlu0 %v780, 112
    %v946 = vpop.permute.xlu0 %945
    %v947 = vsel %vm372, %v942, %v944
    %v948 = vsel %vm372, %v944, %v946
    %v952 = vsel %vm679, %v940, 0
    %954 = vmatpush.msra.mxu0 0.0
    %955 = vmatpush.msra.mxu0 0.0
    %956 = vmatpush.msra.mxu0 0.0
    %957 = vmatpush.msra.mxu0 0.0
    %958 = vmatpush.msra.mxu0 0.0
    %959 = vmatpush.msra.mxu0 0.0
    %960 = vmatpush.msra.mxu0 0.0
    %961 = vmatpush.msra.mxu0 0.0
    %962 = vmatpush.msra.mxu0 0.0
    %963 = vmatpush.msra.mxu0 0.0
    %964 = vmatpush.msra.mxu0 0.0
    %965 = vmatpush.msra.mxu0 0.0
    %966 = vmatpush.msra.mxu0 0.0
    %967 = vmatpush.msra.mxu0 0.0
    %968 = vmatpush.msra.mxu0 0.0
    %969 = vmatpush.msra.mxu0 %v947
    %970 = vmatmul.f32.gmra.mxu0 %v952
    %v971 = vpop.f32.mrf.mxu0
    %v972 = vadd.f32 0.0, %v971
    %973 = vdwg.mxu0
    %974 = vmatpush.msra.mxu0 0.0
    %975 = vmatpush.msra.mxu0 0.0
    %976 = vmatpush.msra.mxu0 0.0
    %977 = vmatpush.msra.mxu0 0.0
    %978 = vmatpush.msra.mxu0 0.0
    %979 = vmatpush.msra.mxu0 0.0
    %980 = vmatpush.msra.mxu0 0.0
    %981 = vmatpush.msra.mxu0 0.0
    %982 = vmatpush.msra.mxu0 0.0
    %983 = vmatpush.msra.mxu0 0.0
    %984 = vmatpush.msra.mxu0 0.0
    %985 = vmatpush.msra.mxu0 0.0
    %986 = vmatpush.msra.mxu0 0.0
    %987 = vmatpush.msra.mxu0 0.0
    %988 = vmatpush.msra.mxu0 0.0
    %989 = vmatpush.msra.mxu0 %v948
    %990 = vmatmul.f32.gmra.mxu0 %v952
    %v991 = vpop.f32.mrf.mxu0
    %v992 = vadd.f32 0.0, %v991
    %993 = vdwg.mxu0
    %v994 = vadd.f32 %v917, %v972
    %v995 = vadd.f32 %v937, %v992
    %s996 = scalar_lea.vmem %s4, 8
    %v997 = vld [vmem:[%s996] sm:$0xf]
    %s998 = scalar_lea.vmem %s4, 20
    %v999 = vld [vmem:[%s998] sm:$0xf]
    %1000 = vrot.lane.b32.xlu0 %v778, 127
    %v1001 = vpop.permute.xlu0 %1000
    %1002 = vrot.lane.b32.xlu0 %v779, 127
    %v1003 = vpop.permute.xlu0 %1002
    %1004 = vrot.lane.b32.xlu0 %v780, 127
    %v1005 = vpop.permute.xlu0 %1004
    %v1006 = vsel %vm446, %v1001, %v1003
    %v1007 = vsel %vm446, %v1003, %v1005
    %v1011 = vsel %vm679, %v999, 0
    %1013 = vmatpush.msra.mxu0 0.0
    %1014 = vmatpush.msra.mxu0 0.0
    %1015 = vmatpush.msra.mxu0 0.0
    %1016 = vmatpush.msra.mxu0 0.0
    %1017 = vmatpush.msra.mxu0 0.0
    %1018 = vmatpush.msra.mxu0 0.0
    %1019 = vmatpush.msra.mxu0 0.0
    %1020 = vmatpush.msra.mxu0 0.0
    %1021 = vmatpush.msra.mxu0 0.0
    %1022 = vmatpush.msra.mxu0 0.0
    %1023 = vmatpush.msra.mxu0 0.0
    %1024 = vmatpush.msra.mxu0 0.0
    %1025 = vmatpush.msra.mxu0 0.0
    %1026 = vmatpush.msra.mxu0 0.0
    %1027 = vmatpush.msra.mxu0 0.0
    %1028 = vmatpush.msra.mxu0 %v1006
    %1029 = vmatmul.f32.gmra.mxu0 %v1011
    %v1030 = vpop.f32.mrf.mxu0
    %v1031 = vadd.f32 0.0, %v1030
    %1032 = vdwg.mxu0
    %1033 = vmatpush.msra.mxu0 0.0
    %1034 = vmatpush.msra.mxu0 0.0
    %1035 = vmatpush.msra.mxu0 0.0
    %1036 = vmatpush.msra.mxu0 0.0
    %1037 = vmatpush.msra.mxu0 0.0
    %1038 = vmatpush.msra.mxu0 0.0
    %1039 = vmatpush.msra.mxu0 0.0
    %1040 = vmatpush.msra.mxu0 0.0
    %1041 = vmatpush.msra.mxu0 0.0
    %1042 = vmatpush.msra.mxu0 0.0
    %1043 = vmatpush.msra.mxu0 0.0
    %1044 = vmatpush.msra.mxu0 0.0
    %1045 = vmatpush.msra.mxu0 0.0
    %1046 = vmatpush.msra.mxu0 0.0
    %1047 = vmatpush.msra.mxu0 0.0
    %1048 = vmatpush.msra.mxu0 %v1007
    %1049 = vmatmul.f32.gmra.mxu0 %v1011
    %v1050 = vpop.f32.mrf.mxu0
    %v1051 = vadd.f32 0.0, %v1050
    %1052 = vdwg.mxu0
    %1053 = vrot.lane.b32.xlu0 %v661, 15
    %v1054 = vpop.permute.xlu0 %1053
    %1055 = vrot.lane.b32.xlu0 %v662, 15
    %v1056 = vpop.permute.xlu0 %1055
    %1057 = vrot.lane.b32.xlu0 %v663, 15
    %v1058 = vpop.permute.xlu0 %1057
    %v1059 = vsel %vm510, %v1054, %v1056
    %v1060 = vsel %vm510, %v1056, %v1058
    %v1064 = vsel %vm679, %v997, 0
    %1066 = vmatpush.msra.mxu0 0.0
    %1067 = vmatpush.msra.mxu0 0.0
    %1068 = vmatpush.msra.mxu0 0.0
    %1069 = vmatpush.msra.mxu0 0.0
    %1070 = vmatpush.msra.mxu0 0.0
    %1071 = vmatpush.msra.mxu0 0.0
    %1072 = vmatpush.msra.mxu0 0.0
    %1073 = vmatpush.msra.mxu0 0.0
    %1074 = vmatpush.msra.mxu0 0.0
    %1075 = vmatpush.msra.mxu0 0.0
    %1076 = vmatpush.msra.mxu0 0.0
    %1077 = vmatpush.msra.mxu0 0.0
    %1078 = vmatpush.msra.mxu0 0.0
    %1079 = vmatpush.msra.mxu0 0.0
    %1080 = vmatpush.msra.mxu0 0.0
    %1081 = vmatpush.msra.mxu0 %v1059
    %1082 = vmatmul.f32.gmra.mxu0 %v1064
    %v1083 = vpop.f32.mrf.mxu0
    %v1084 = vadd.f32 %v1031, %v1083
    %1085 = vdwg.mxu0
    %1086 = vmatpush.msra.mxu0 0.0
    %1087 = vmatpush.msra.mxu0 0.0
    %1088 = vmatpush.msra.mxu0 0.0
    %1089 = vmatpush.msra.mxu0 0.0
    %1090 = vmatpush.msra.mxu0 0.0
    %1091 = vmatpush.msra.mxu0 0.0
    %1092 = vmatpush.msra.mxu0 0.0
    %1093 = vmatpush.msra.mxu0 0.0
    %1094 = vmatpush.msra.mxu0 0.0
    %1095 = vmatpush.msra.mxu0 0.0
    %1096 = vmatpush.msra.mxu0 0.0
    %1097 = vmatpush.msra.mxu0 0.0
    %1098 = vmatpush.msra.mxu0 0.0
    %1099 = vmatpush.msra.mxu0 0.0
    %1100 = vmatpush.msra.mxu0 0.0
    %1101 = vmatpush.msra.mxu0 %v1060
    %1102 = vmatmul.f32.gmra.mxu0 %v1064
    %v1103 = vpop.f32.mrf.mxu0
    %v1104 = vadd.f32 %v1051, %v1103
    %1105 = vdwg.mxu0
    %s1106 = scalar_lea.vmem %s4, 32
    %v1107 = vld [vmem:[%s1106] sm:$0xf]
    %1108 = vrot.lane.b32.xlu0 %v778, 111
    %v1109 = vpop.permute.xlu0 %1108
    %1110 = vrot.lane.b32.xlu0 %v779, 111
    %v1111 = vpop.permute.xlu0 %1110
    %1112 = vrot.lane.b32.xlu0 %v780, 111
    %v1113 = vpop.permute.xlu0 %1112
    %v1114 = vsel %vm578, %v1109, %v1111
    %v1115 = vsel %vm578, %v1111, %v1113
    %v1119 = vsel %vm679, %v1107, 0
    %1121 = vmatpush.msra.mxu0 0.0
    %1122 = vmatpush.msra.mxu0 0.0
    %1123 = vmatpush.msra.mxu0 0.0
    %1124 = vmatpush.msra.mxu0 0.0
    %1125 = vmatpush.msra.mxu0 0.0
    %1126 = vmatpush.msra.mxu0 0.0
    %1127 = vmatpush.msra.mxu0 0.0
    %1128 = vmatpush.msra.mxu0 0.0
    %1129 = vmatpush.msra.mxu0 0.0
    %1130 = vmatpush.msra.mxu0 0.0
    %1131 = vmatpush.msra.mxu0 0.0
    %1132 = vmatpush.msra.mxu0 0.0
    %1133 = vmatpush.msra.mxu0 0.0
    %1134 = vmatpush.msra.mxu0 0.0
    %1135 = vmatpush.msra.mxu0 0.0
    %1136 = vmatpush.msra.mxu0 %v1114
    %1137 = vmatmul.f32.gmra.mxu0 %v1119
    %v1138 = vpop.f32.mrf.mxu0
    %v1139 = vadd.f32 0.0, %v1138
    %1140 = vdwg.mxu0
    %1141 = vmatpush.msra.mxu0 0.0
    %1142 = vmatpush.msra.mxu0 0.0
    %1143 = vmatpush.msra.mxu0 0.0
    %1144 = vmatpush.msra.mxu0 0.0
    %1145 = vmatpush.msra.mxu0 0.0
    %1146 = vmatpush.msra.mxu0 0.0
    %1147 = vmatpush.msra.mxu0 0.0
    %1148 = vmatpush.msra.mxu0 0.0
    %1149 = vmatpush.msra.mxu0 0.0
    %1150 = vmatpush.msra.mxu0 0.0
    %1151 = vmatpush.msra.mxu0 0.0
    %1152 = vmatpush.msra.mxu0 0.0
    %1153 = vmatpush.msra.mxu0 0.0
    %1154 = vmatpush.msra.mxu0 0.0
    %1155 = vmatpush.msra.mxu0 0.0
    %1156 = vmatpush.msra.mxu0 %v1115
    %1157 = vmatmul.f32.gmra.mxu0 %v1119
    %v1158 = vpop.f32.mrf.mxu0
    %v1159 = vadd.f32 0.0, %v1158
    %1160 = vdwg.mxu0
    %v1161 = vadd.f32 %v1084, %v1139
    %v1162 = vadd.f32 %v1104, %v1159
    %v1163 = vmul.f32 %v837, %v631
    %v1164 = vmul.f32 %v838, %v632
    %v1165 = vadd.f32 %v994, %v1163
    %v1166 = vadd.f32 %v995, %v1164
    %v1167 = vmul.f32 %v1161, %v640
    %v1168 = vmul.f32 %v1162, %v641
    %v1169 = vadd.f32 %v1165, %v1167
    %v1170 = vadd.f32 %v1166, %v1168
    %v1171 = vld [vmem:[%s5] sm:$0xf]
    %1173 = vset.pattern.permute.xlu0 0
    %1174 = vperm.xlu0 %1173, %v1171
    %v1175 = vpop.permute.xlu0 %1174
    %v1177 = vadd.f32 %v1169, %v1175
    %v1178 = vadd.f32 %v1170, %v1175
    %v1181 = vrot.slane %v1178, 4
    %v1182 = vsel %vm55, %v1177, %v1181
    %1184 = vst [vmem:[#allocation3] sm:$0xff] %v1182
    %v1185 = vld [vmem:[%s2] sm:$0xff]
    %s1186 = scalar_lea.vmem %s0, 16
    %v1187 = vld [vmem:[%s1186] sm:$0xff]
    %v1188 = vld [vmem:[%s1186 + $0x8] sm:$0xf]
    %v1189 = vld [vmem:[%s32] sm:$0xff]
    %1192 = vst [vmem:[#allocation1] ss:$2 sm:$0xff] %v1187
    %s1193 = scalar_lea.vmem [#allocation1], 16
    %1194 = vst [vmem:[%s1193] ss:$2 sm:$0xff] %v1188
    %v1195 = vld.sshfl [vmem:[#allocation1] sm:$0xff pattern:$0x75316420]
    %v1196 = vld.sshfl [vmem:[#allocation1 + $0x8] sm:$0xff pattern:$0x75316420]
    %v1197 = vld.sshfl [vmem:[#allocation1 + $0x10] sm:$0xff pattern:$0x75316420]
    %1198 = vrot.lane.b32.xlu0 %v1195, 1
    %v1199 = vpop.permute.xlu0 %1198
    %1200 = vrot.lane.b32.xlu0 %v1196, 1
    %v1201 = vpop.permute.xlu0 %1200
    %1202 = vrot.lane.b32.xlu0 %v1197, 1
    %v1203 = vpop.permute.xlu0 %1202
    %v1204 = vsel %vm48, %v1199, %v1201
    %v1205 = vsel %vm48, %v1201, %v1203
    %v1207 = vsel %vm51, %v1189, 0
    %v1209 = vsel %vm55, %v1204, 0
    %v1211 = vsel %vm55, %v1205, 0
    %1213 = vmatpush.msra.mxu0 0.0
    %1214 = vmatpush.msra.mxu0 0.0
    %1215 = vmatpush.msra.mxu0 0.0
    %1216 = vmatpush.msra.mxu0 0.0
    %1217 = vmatpush.msra.mxu0 0.0
    %1218 = vmatpush.msra.mxu0 0.0
    %1219 = vmatpush.msra.mxu0 0.0
    %1220 = vmatpush.msra.mxu0 0.0
    %1221 = vmatpush.msra.mxu0 0.0
    %1222 = vmatpush.msra.mxu0 0.0
    %1223 = vmatpush.msra.mxu0 0.0
    %1224 = vmatpush.msra.mxu0 0.0
    %1225 = vmatpush.msra.mxu0 0.0
    %1226 = vmatpush.msra.mxu0 0.0
    %1227 = vmatpush.msra.mxu0 0.0
    %1228 = vmatpush.msra.mxu0 %v1209
    %1229 = vmatmul.f32.gmra.mxu0 %v1207
    %v1230 = vpop.f32.mrf.mxu0
    %v1231 = vadd.f32 0.0, %v1230
    %1232 = vdwg.mxu0
    %1233 = vmatpush.msra.mxu0 0.0
    %1234 = vmatpush.msra.mxu0 0.0
    %1235 = vmatpush.msra.mxu0 0.0
    %1236 = vmatpush.msra.mxu0 0.0
    %1237 = vmatpush.msra.mxu0 0.0
    %1238 = vmatpush.msra.mxu0 0.0
    %1239 = vmatpush.msra.mxu0 0.0
    %1240 = vmatpush.msra.mxu0 0.0
    %1241 = vmatpush.msra.mxu0 0.0
    %1242 = vmatpush.msra.mxu0 0.0
    %1243 = vmatpush.msra.mxu0 0.0
    %1244 = vmatpush.msra.mxu0 0.0
    %1245 = vmatpush.msra.mxu0 0.0
    %1246 = vmatpush.msra.mxu0 0.0
    %1247 = vmatpush.msra.mxu0 0.0
    %1248 = vmatpush.msra.mxu0 %v1211
    %1249 = vmatmul.f32.gmra.mxu0 %v1207
    %v1250 = vpop.f32.mrf.mxu0
    %v1251 = vadd.f32 0.0, %v1250
    %1252 = vdwg.mxu0
    %1253 = vst [vmem:[#allocation1] ss:$2 sm:$0xff] %v1187
    %s1254 = scalar_lea.vmem [#allocation1], 16
    %1255 = vst [vmem:[%s1254] ss:$2 sm:$0xff] %v1188
    %v1256 = vld.sshfl [vmem:[#allocation1] sm:$0xff pattern:$0x75316420]
    %v1257 = vld.sshfl [vmem:[#allocation1 + $0x8] sm:$0xff pattern:$0x75316420]
    %v1258 = vld.sshfl [vmem:[#allocation1 + $0x10] sm:$0xff pattern:$0x75316420]
    %1259 = vrot.lane.b32.xlu0 %v1256, 17
    %v1260 = vpop.permute.xlu0 %1259
    %1261 = vrot.lane.b32.xlu0 %v1257, 17
    %v1262 = vpop.permute.xlu0 %1261
    %1263 = vrot.lane.b32.xlu0 %v1258, 17
    %v1264 = vpop.permute.xlu0 %1263
    %v1265 = vsel %vm112, %v1260, %v1262
    %v1266 = vsel %vm112, %v1262, %v1264
    %v1268 = vsel %vm51, %v1185, 0
    %v1270 = vsel %vm55, %v1265, 0
    %v1272 = vsel %vm55, %v1266, 0
    %1274 = vmatpush.msra.mxu0 0.0
    %1275 = vmatpush.msra.mxu0 0.0
    %1276 = vmatpush.msra.mxu0 0.0
    %1277 = vmatpush.msra.mxu0 0.0
    %1278 = vmatpush.msra.mxu0 0.0
    %1279 = vmatpush.msra.mxu0 0.0
    %1280 = vmatpush.msra.mxu0 0.0
    %1281 = vmatpush.msra.mxu0 0.0
    %1282 = vmatpush.msra.mxu0 0.0
    %1283 = vmatpush.msra.mxu0 0.0
    %1284 = vmatpush.msra.mxu0 0.0
    %1285 = vmatpush.msra.mxu0 0.0
    %1286 = vmatpush.msra.mxu0 0.0
    %1287 = vmatpush.msra.mxu0 0.0
    %1288 = vmatpush.msra.mxu0 0.0
    %1289 = vmatpush.msra.mxu0 %v1270
    %1290 = vmatmul.f32.gmra.mxu0 %v1268
    %v1291 = vpop.f32.mrf.mxu0
    %v1292 = vadd.f32 %v1231, %v1291
    %1293 = vdwg.mxu0
    %1294 = vmatpush.msra.mxu0 0.0
    %1295 = vmatpush.msra.mxu0 0.0
    %1296 = vmatpush.msra.mxu0 0.0
    %1297 = vmatpush.msra.mxu0 0.0
    %1298 = vmatpush.msra.mxu0 0.0
    %1299 = vmatpush.msra.mxu0 0.0
    %1300 = vmatpush.msra.mxu0 0.0
    %1301 = vmatpush.msra.mxu0 0.0
    %1302 = vmatpush.msra.mxu0 0.0
    %1303 = vmatpush.msra.mxu0 0.0
    %1304 = vmatpush.msra.mxu0 0.0
    %1305 = vmatpush.msra.mxu0 0.0
    %1306 = vmatpush.msra.mxu0 0.0
    %1307 = vmatpush.msra.mxu0 0.0
    %1308 = vmatpush.msra.mxu0 0.0
    %1309 = vmatpush.msra.mxu0 %v1272
    %1310 = vmatmul.f32.gmra.mxu0 %v1268
    %v1311 = vpop.f32.mrf.mxu0
    %v1312 = vadd.f32 %v1251, %v1311
    %1313 = vdwg.mxu0
    %v1314 = vld [vmem:[%s162] sm:$0xff]
    %v1315 = vld [vmem:[%s1186 + $0x4] sm:$0xff]
    %v1316 = vld [vmem:[%s1186 + $0xc] sm:$0xf]
    %1319 = vst [vmem:[#allocation1] ss:$2 sm:$0xff] %v1315
    %s1320 = scalar_lea.vmem [#allocation1], 16
    %1321 = vst [vmem:[%s1320] ss:$2 sm:$0xff] %v1316
    %v1322 = vld.sshfl [vmem:[#allocation1] sm:$0xff pattern:$0x75316420]
    %v1323 = vld.sshfl [vmem:[#allocation1 + $0x8] sm:$0xff pattern:$0x75316420]
    %v1324 = vld.sshfl [vmem:[#allocation1 + $0x10] sm:$0xff pattern:$0x75316420]
    %1325 = vrot.lane.b32.xlu0 %v1322, 113
    %v1326 = vpop.permute.xlu0 %1325
    %1327 = vrot.lane.b32.xlu0 %v1323, 113
    %v1328 = vpop.permute.xlu0 %1327
    %1329 = vrot.lane.b32.xlu0 %v1324, 113
    %v1330 = vpop.permute.xlu0 %1329
    %v1331 = vsel %vm180, %v1326, %v1328
    %v1332 = vsel %vm180, %v1328, %v1330
    %v1334 = vsel %vm51, %v1314, 0
    %v1336 = vsel %vm55, %v1331, 0
    %v1338 = vsel %vm55, %v1332, 0
    %1340 = vmatpush.msra.mxu0 0.0
    %1341 = vmatpush.msra.mxu0 0.0
    %1342 = vmatpush.msra.mxu0 0.0
    %1343 = vmatpush.msra.mxu0 0.0
    %1344 = vmatpush.msra.mxu0 0.0
    %1345 = vmatpush.msra.mxu0 0.0
    %1346 = vmatpush.msra.mxu0 0.0
    %1347 = vmatpush.msra.mxu0 0.0
    %1348 = vmatpush.msra.mxu0 0.0
    %1349 = vmatpush.msra.mxu0 0.0
    %1350 = vmatpush.msra.mxu0 0.0
    %1351 = vmatpush.msra.mxu0 0.0
    %1352 = vmatpush.msra.mxu0 0.0
    %1353 = vmatpush.msra.mxu0 0.0
    %1354 = vmatpush.msra.mxu0 0.0
    %1355 = vmatpush.msra.mxu0 %v1336
    %1356 = vmatmul.f32.gmra.mxu0 %v1334
    %v1357 = vpop.f32.mrf.mxu0
    %v1358 = vadd.f32 0.0, %v1357
    %1359 = vdwg.mxu0
    %1360 = vmatpush.msra.mxu0 0.0
    %1361 = vmatpush.msra.mxu0 0.0
    %1362 = vmatpush.msra.mxu0 0.0
    %1363 = vmatpush.msra.mxu0 0.0
    %1364 = vmatpush.msra.mxu0 0.0
    %1365 = vmatpush.msra.mxu0 0.0
    %1366 = vmatpush.msra.mxu0 0.0
    %1367 = vmatpush.msra.mxu0 0.0
    %1368 = vmatpush.msra.mxu0 0.0
    %1369 = vmatpush.msra.mxu0 0.0
    %1370 = vmatpush.msra.mxu0 0.0
    %1371 = vmatpush.msra.mxu0 0.0
    %1372 = vmatpush.msra.mxu0 0.0
    %1373 = vmatpush.msra.mxu0 0.0
    %1374 = vmatpush.msra.mxu0 0.0
    %1375 = vmatpush.msra.mxu0 %v1338
    %1376 = vmatmul.f32.gmra.mxu0 %v1334
    %v1377 = vpop.f32.mrf.mxu0
    %v1378 = vadd.f32 0.0, %v1377
    %1379 = vdwg.mxu0
    %v1380 = vadd.f32 %v1292, %v1358
    %v1381 = vadd.f32 %v1312, %v1378
    %v1382 = vld [vmem:[%s232] sm:$0xff]
    %v1383 = vld [vmem:[%s1186] sm:$0xff]
    %v1384 = vld [vmem:[%s1186 + $0x8] sm:$0xf]
    %v1385 = vld [vmem:[%s236] sm:$0xff]
    %v1386 = vld [vmem:[%s1186 + $0x4] sm:$0xff]
    %1388 = vst [vmem:[#allocation1] ss:$2 sm:$0xff] %v1386
    %v1389 = vld.sshfl [vmem:[#allocation1] sm:$0xff pattern:$0x75316420]
    %v1390 = vld.sshfl [vmem:[#allocation1 + $0x8] sm:$0xff pattern:$0x75316420]
    %v1392 = vsel %vm51, %v1385, 0
    %v1394 = vsel %vm55, %v1389, 0
    %v1396 = vsel %vm55, %v1390, 0
    %1398 = vmatpush.msra.mxu0 0.0
    %1399 = vmatpush.msra.mxu0 0.0
    %1400 = vmatpush.msra.mxu0 0.0
    %1401 = vmatpush.msra.mxu0 0.0
    %1402 = vmatpush.msra.mxu0 0.0
    %1403 = vmatpush.msra.mxu0 0.0
    %1404 = vmatpush.msra.mxu0 0.0
    %1405 = vmatpush.msra.mxu0 0.0
    %1406 = vmatpush.msra.mxu0 0.0
    %1407 = vmatpush.msra.mxu0 0.0
    %1408 = vmatpush.msra.mxu0 0.0
    %1409 = vmatpush.msra.mxu0 0.0
    %1410 = vmatpush.msra.mxu0 0.0
    %1411 = vmatpush.msra.mxu0 0.0
    %1412 = vmatpush.msra.mxu0 0.0
    %1413 = vmatpush.msra.mxu0 %v1394
    %1414 = vmatmul.f32.gmra.mxu0 %v1392
    %v1415 = vpop.f32.mrf.mxu0
    %v1416 = vadd.f32 0.0, %v1415
    %1417 = vdwg.mxu0
    %1418 = vmatpush.msra.mxu0 0.0
    %1419 = vmatpush.msra.mxu0 0.0
    %1420 = vmatpush.msra.mxu0 0.0
    %1421 = vmatpush.msra.mxu0 0.0
    %1422 = vmatpush.msra.mxu0 0.0
    %1423 = vmatpush.msra.mxu0 0.0
    %1424 = vmatpush.msra.mxu0 0.0
    %1425 = vmatpush.msra.mxu0 0.0
    %1426 = vmatpush.msra.mxu0 0.0
    %1427 = vmatpush.msra.mxu0 0.0
    %1428 = vmatpush.msra.mxu0 0.0
    %1429 = vmatpush.msra.mxu0 0.0
    %1430 = vmatpush.msra.mxu0 0.0
    %1431 = vmatpush.msra.mxu0 0.0
    %1432 = vmatpush.msra.mxu0 0.0
    %1433 = vmatpush.msra.mxu0 %v1396
    %1434 = vmatmul.f32.gmra.mxu0 %v1392
    %v1435 = vpop.f32.mrf.mxu0
    %v1436 = vadd.f32 0.0, %v1435
    %1437 = vdwg.mxu0
    %1440 = vst [vmem:[#allocation1] ss:$2 sm:$0xff] %v1383
    %s1441 = scalar_lea.vmem [#allocation1], 16
    %1442 = vst [vmem:[%s1441] ss:$2 sm:$0xff] %v1384
    %v1443 = vld.sshfl [vmem:[#allocation1] sm:$0xff pattern:$0x75316420]
    %v1444 = vld.sshfl [vmem:[#allocation1 + $0x8] sm:$0xff pattern:$0x75316420]
    %v1445 = vld.sshfl [vmem:[#allocation1 + $0x10] sm:$0xff pattern:$0x75316420]
    %1446 = vrot.lane.b32.xlu0 %v1443, 16
    %v1447 = vpop.permute.xlu0 %1446
    %1448 = vrot.lane.b32.xlu0 %v1444, 16
    %v1449 = vpop.permute.xlu0 %1448
    %1450 = vrot.lane.b32.xlu0 %v1445, 16
    %v1451 = vpop.permute.xlu0 %1450
    %v1452 = vsel %vm304, %v1447, %v1449
    %v1453 = vsel %vm304, %v1449, %v1451
    %v1455 = vsel %vm51, %v1382, 0
    %v1457 = vsel %vm55, %v1452, 0
    %v1459 = vsel %vm55, %v1453, 0
    %1461 = vmatpush.msra.mxu0 0.0
    %1462 = vmatpush.msra.mxu0 0.0
    %1463 = vmatpush.msra.mxu0 0.0
    %1464 = vmatpush.msra.mxu0 0.0
    %1465 = vmatpush.msra.mxu0 0.0
    %1466 = vmatpush.msra.mxu0 0.0
    %1467 = vmatpush.msra.mxu0 0.0
    %1468 = vmatpush.msra.mxu0 0.0
    %1469 = vmatpush.msra.mxu0 0.0
    %1470 = vmatpush.msra.mxu0 0.0
    %1471 = vmatpush.msra.mxu0 0.0
    %1472 = vmatpush.msra.mxu0 0.0
    %1473 = vmatpush.msra.mxu0 0.0
    %1474 = vmatpush.msra.mxu0 0.0
    %1475 = vmatpush.msra.mxu0 0.0
    %1476 = vmatpush.msra.mxu0 %v1457
    %1477 = vmatmul.f32.gmra.mxu0 %v1455
    %v1478 = vpop.f32.mrf.mxu0
    %v1479 = vadd.f32 %v1416, %v1478
    %1480 = vdwg.mxu0
    %1481 = vmatpush.msra.mxu0 0.0
    %1482 = vmatpush.msra.mxu0 0.0
    %1483 = vmatpush.msra.mxu0 0.0
    %1484 = vmatpush.msra.mxu0 0.0
    %1485 = vmatpush.msra.mxu0 0.0
    %1486 = vmatpush.msra.mxu0 0.0
    %1487 = vmatpush.msra.mxu0 0.0
    %1488 = vmatpush.msra.mxu0 0.0
    %1489 = vmatpush.msra.mxu0 0.0
    %1490 = vmatpush.msra.mxu0 0.0
    %1491 = vmatpush.msra.mxu0 0.0
    %1492 = vmatpush.msra.mxu0 0.0
    %1493 = vmatpush.msra.mxu0 0.0
    %1494 = vmatpush.msra.mxu0 0.0
    %1495 = vmatpush.msra.mxu0 0.0
    %1496 = vmatpush.msra.mxu0 %v1459
    %1497 = vmatmul.f32.gmra.mxu0 %v1455
    %v1498 = vpop.f32.mrf.mxu0
    %v1499 = vadd.f32 %v1436, %v1498
    %1500 = vdwg.mxu0
    %v1501 = vld [vmem:[%s354] sm:$0xff]
    %v1502 = vld [vmem:[%s1186 + $0x4] sm:$0xff]
    %v1503 = vld [vmem:[%s1186 + $0xc] sm:$0xf]
    %1506 = vst [vmem:[#allocation1] ss:$2 sm:$0xff] %v1502
    %s1507 = scalar_lea.vmem [#allocation1], 16
    %1508 = vst [vmem:[%s1507] ss:$2 sm:$0xff] %v1503
    %v1509 = vld.sshfl [vmem:[#allocation1] sm:$0xff pattern:$0x75316420]
    %v1510 = vld.sshfl [vmem:[#allocation1 + $0x8] sm:$0xff pattern:$0x75316420]
    %v1511 = vld.sshfl [vmem:[#allocation1 + $0x10] sm:$0xff pattern:$0x75316420]
    %1512 = vrot.lane.b32.xlu0 %v1509, 112
    %v1513 = vpop.permute.xlu0 %1512
    %1514 = vrot.lane.b32.xlu0 %v1510, 112
    %v1515 = vpop.permute.xlu0 %1514
    %1516 = vrot.lane.b32.xlu0 %v1511, 112
    %v1517 = vpop.permute.xlu0 %1516
    %v1518 = vsel %vm372, %v1513, %v1515
    %v1519 = vsel %vm372, %v1515, %v1517
    %v1521 = vsel %vm51, %v1501, 0
    %v1523 = vsel %vm55, %v1518, 0
    %v1525 = vsel %vm55, %v1519, 0
    %1527 = vmatpush.msra.mxu0 0.0
    %1528 = vmatpush.msra.mxu0 0.0
    %1529 = vmatpush.msra.mxu0 0.0
    %1530 = vmatpush.msra.mxu0 0.0
    %1531 = vmatpush.msra.mxu0 0.0
    %1532 = vmatpush.msra.mxu0 0.0
    %1533 = vmatpush.msra.mxu0 0.0
    %1534 = vmatpush.msra.mxu0 0.0
    %1535 = vmatpush.msra.mxu0 0.0
    %1536 = vmatpush.msra.mxu0 0.0
    %1537 = vmatpush.msra.mxu0 0.0
    %1538 = vmatpush.msra.mxu0 0.0
    %1539 = vmatpush.msra.mxu0 0.0
    %1540 = vmatpush.msra.mxu0 0.0
    %1541 = vmatpush.msra.mxu0 0.0
    %1542 = vmatpush.msra.mxu0 %v1523
    %1543 = vmatmul.f32.gmra.mxu0 %v1521
    %v1544 = vpop.f32.mrf.mxu0
    %v1545 = vadd.f32 0.0, %v1544
    %1546 = vdwg.mxu0
    %1547 = vmatpush.msra.mxu0 0.0
    %1548 = vmatpush.msra.mxu0 0.0
    %1549 = vmatpush.msra.mxu0 0.0
    %1550 = vmatpush.msra.mxu0 0.0
    %1551 = vmatpush.msra.mxu0 0.0
    %1552 = vmatpush.msra.mxu0 0.0
    %1553 = vmatpush.msra.mxu0 0.0
    %1554 = vmatpush.msra.mxu0 0.0
    %1555 = vmatpush.msra.mxu0 0.0
    %1556 = vmatpush.msra.mxu0 0.0
    %1557 = vmatpush.msra.mxu0 0.0
    %1558 = vmatpush.msra.mxu0 0.0
    %1559 = vmatpush.msra.mxu0 0.0
    %1560 = vmatpush.msra.mxu0 0.0
    %1561 = vmatpush.msra.mxu0 0.0
    %1562 = vmatpush.msra.mxu0 %v1525
    %1563 = vmatmul.f32.gmra.mxu0 %v1521
    %v1564 = vpop.f32.mrf.mxu0
    %v1565 = vadd.f32 0.0, %v1564
    %1566 = vdwg.mxu0
    %v1567 = vadd.f32 %v1479, %v1545
    %v1568 = vadd.f32 %v1499, %v1565
    %v1569 = vld [vmem:[%s424] sm:$0xff]
    %v1570 = vld [vmem:[%s1186] sm:$0xff]
    %v1571 = vld [vmem:[%s1186 + $0x8] sm:$0xf]
    %v1572 = vld [vmem:[%s428] sm:$0xff]
    %v1573 = vld [vmem:[%s1186 + $0x4] sm:$0xff]
    %v1574 = vld [vmem:[%s1186 + $0xc] sm:$0xf]
    %1577 = vst [vmem:[#allocation1] ss:$2 sm:$0xff] %v1573
    %s1578 = scalar_lea.vmem [#allocation1], 16
    %1579 = vst [vmem:[%s1578] ss:$2 sm:$0xff] %v1574
    %v1580 = vld.sshfl [vmem:[#allocation1] sm:$0xff pattern:$0x75316420]
    %v1581 = vld.sshfl [vmem:[#allocation1 + $0x8] sm:$0xff pattern:$0x75316420]
    %v1582 = vld.sshfl [vmem:[#allocation1 + $0x10] sm:$0xff pattern:$0x75316420]
    %1583 = vrot.lane.b32.xlu0 %v1580, 127
    %v1584 = vpop.permute.xlu0 %1583
    %1585 = vrot.lane.b32.xlu0 %v1581, 127
    %v1586 = vpop.permute.xlu0 %1585
    %1587 = vrot.lane.b32.xlu0 %v1582, 127
    %v1588 = vpop.permute.xlu0 %1587
    %v1589 = vsel %vm446, %v1584, %v1586
    %v1590 = vsel %vm446, %v1586, %v1588
    %v1592 = vsel %vm51, %v1572, 0
    %v1594 = vsel %vm55, %v1589, 0
    %v1596 = vsel %vm55, %v1590, 0
    %1598 = vmatpush.msra.mxu0 0.0
    %1599 = vmatpush.msra.mxu0 0.0
    %1600 = vmatpush.msra.mxu0 0.0
    %1601 = vmatpush.msra.mxu0 0.0
    %1602 = vmatpush.msra.mxu0 0.0
    %1603 = vmatpush.msra.mxu0 0.0
    %1604 = vmatpush.msra.mxu0 0.0
    %1605 = vmatpush.msra.mxu0 0.0
    %1606 = vmatpush.msra.mxu0 0.0
    %1607 = vmatpush.msra.mxu0 0.0
    %1608 = vmatpush.msra.mxu0 0.0
    %1609 = vmatpush.msra.mxu0 0.0
    %1610 = vmatpush.msra.mxu0 0.0
    %1611 = vmatpush.msra.mxu0 0.0
    %1612 = vmatpush.msra.mxu0 0.0
    %1613 = vmatpush.msra.mxu0 %v1594
    %1614 = vmatmul.f32.gmra.mxu0 %v1592
    %v1615 = vpop.f32.mrf.mxu0
    %v1616 = vadd.f32 0.0, %v1615
    %1617 = vdwg.mxu0
    %1618 = vmatpush.msra.mxu0 0.0
    %1619 = vmatpush.msra.mxu0 0.0
    %1620 = vmatpush.msra.mxu0 0.0
    %1621 = vmatpush.msra.mxu0 0.0
    %1622 = vmatpush.msra.mxu0 0.0
    %1623 = vmatpush.msra.mxu0 0.0
    %1624 = vmatpush.msra.mxu0 0.0
    %1625 = vmatpush.msra.mxu0 0.0
    %1626 = vmatpush.msra.mxu0 0.0
    %1627 = vmatpush.msra.mxu0 0.0
    %1628 = vmatpush.msra.mxu0 0.0
    %1629 = vmatpush.msra.mxu0 0.0
    %1630 = vmatpush.msra.mxu0 0.0
    %1631 = vmatpush.msra.mxu0 0.0
    %1632 = vmatpush.msra.mxu0 0.0
    %1633 = vmatpush.msra.mxu0 %v1596
    %1634 = vmatmul.f32.gmra.mxu0 %v1592
    %v1635 = vpop.f32.mrf.mxu0
    %v1636 = vadd.f32 0.0, %v1635
    %1637 = vdwg.mxu0
    %1640 = vst [vmem:[#allocation1] ss:$2 sm:$0xff] %v1570
    %s1641 = scalar_lea.vmem [#allocation1], 16
    %1642 = vst [vmem:[%s1641] ss:$2 sm:$0xff] %v1571
    %v1643 = vld.sshfl [vmem:[#allocation1] sm:$0xff pattern:$0x75316420]
    %v1644 = vld.sshfl [vmem:[#allocation1 + $0x8] sm:$0xff pattern:$0x75316420]
    %v1645 = vld.sshfl [vmem:[#allocation1 + $0x10] sm:$0xff pattern:$0x75316420]
    %1646 = vrot.lane.b32.xlu0 %v1643, 15
    %v1647 = vpop.permute.xlu0 %1646
    %1648 = vrot.lane.b32.xlu0 %v1644, 15
    %v1649 = vpop.permute.xlu0 %1648
    %1650 = vrot.lane.b32.xlu0 %v1645, 15
    %v1651 = vpop.permute.xlu0 %1650
    %v1652 = vsel %vm510, %v1647, %v1649
    %v1653 = vsel %vm510, %v1649, %v1651
    %v1655 = vsel %vm51, %v1569, 0
    %v1657 = vsel %vm55, %v1652, 0
    %v1659 = vsel %vm55, %v1653, 0
    %1661 = vmatpush.msra.mxu0 0.0
    %1662 = vmatpush.msra.mxu0 0.0
    %1663 = vmatpush.msra.mxu0 0.0
    %1664 = vmatpush.msra.mxu0 0.0
    %1665 = vmatpush.msra.mxu0 0.0
    %1666 = vmatpush.msra.mxu0 0.0
    %1667 = vmatpush.msra.mxu0 0.0
    %1668 = vmatpush.msra.mxu0 0.0
    %1669 = vmatpush.msra.mxu0 0.0
    %1670 = vmatpush.msra.mxu0 0.0
    %1671 = vmatpush.msra.mxu0 0.0
    %1672 = vmatpush.msra.mxu0 0.0
    %1673 = vmatpush.msra.mxu0 0.0
    %1674 = vmatpush.msra.mxu0 0.0
    %1675 = vmatpush.msra.mxu0 0.0
    %1676 = vmatpush.msra.mxu0 %v1657
    %1677 = vmatmul.f32.gmra.mxu0 %v1655
    %v1678 = vpop.f32.mrf.mxu0
    %v1679 = vadd.f32 %v1616, %v1678
    %1680 = vdwg.mxu0
    %1681 = vmatpush.msra.mxu0 0.0
    %1682 = vmatpush.msra.mxu0 0.0
    %1683 = vmatpush.msra.mxu0 0.0
    %1684 = vmatpush.msra.mxu0 0.0
    %1685 = vmatpush.msra.mxu0 0.0
    %1686 = vmatpush.msra.mxu0 0.0
    %1687 = vmatpush.msra.mxu0 0.0
    %1688 = vmatpush.msra.mxu0 0.0
    %1689 = vmatpush.msra.mxu0 0.0
    %1690 = vmatpush.msra.mxu0 0.0
    %1691 = vmatpush.msra.mxu0 0.0
    %1692 = vmatpush.msra.mxu0 0.0
    %1693 = vmatpush.msra.mxu0 0.0
    %1694 = vmatpush.msra.mxu0 0.0
    %1695 = vmatpush.msra.mxu0 0.0
    %1696 = vmatpush.msra.mxu0 %v1659
    %1697 = vmatmul.f32.gmra.mxu0 %v1655
    %v1698 = vpop.f32.mrf.mxu0
    %v1699 = vadd.f32 %v1636, %v1698
    %1700 = vdwg.mxu0
    %v1701 = vld [vmem:[%s560] sm:$0xff]
    %v1702 = vld [vmem:[%s1186 + $0x4] sm:$0xff]
    %v1703 = vld [vmem:[%s1186 + $0xc] sm:$0xf]
    %1706 = vst [vmem:[#allocation1] ss:$2 sm:$0xff] %v1702
    %s1707 = scalar_lea.vmem [#allocation1], 16
    %1708 = vst [vmem:[%s1707] ss:$2 sm:$0xff] %v1703
    %v1709 = vld.sshfl [vmem:[#allocation1] sm:$0xff pattern:$0x75316420]
    %v1710 = vld.sshfl [vmem:[#allocation1 + $0x8] sm:$0xff pattern:$0x75316420]
    %v1711 = vld.sshfl [vmem:[#allocation1 + $0x10] sm:$0xff pattern:$0x75316420]
    %1712 = vrot.lane.b32.xlu0 %v1709, 111
    %v1713 = vpop.permute.xlu0 %1712
    %1714 = vrot.lane.b32.xlu0 %v1710, 111
    %v1715 = vpop.permute.xlu0 %1714
    %1716 = vrot.lane.b32.xlu0 %v1711, 111
    %v1717 = vpop.permute.xlu0 %1716
    %v1718 = vsel %vm578, %v1713, %v1715
    %v1719 = vsel %vm578, %v1715, %v1717
    %v1721 = vsel %vm51, %v1701, 0
    %v1723 = vsel %vm55, %v1718, 0
    %v1725 = vsel %vm55, %v1719, 0
    %1727 = vmatpush.msra.mxu0 0.0
    %1728 = vmatpush.msra.mxu0 0.0
    %1729 = vmatpush.msra.mxu0 0.0
    %1730 = vmatpush.msra.mxu0 0.0
    %1731 = vmatpush.msra.mxu0 0.0
    %1732 = vmatpush.msra.mxu0 0.0
    %1733 = vmatpush.msra.mxu0 0.0
    %1734 = vmatpush.msra.mxu0 0.0
    %1735 = vmatpush.msra.mxu0 0.0
    %1736 = vmatpush.msra.mxu0 0.0
    %1737 = vmatpush.msra.mxu0 0.0
    %1738 = vmatpush.msra.mxu0 0.0
    %1739 = vmatpush.msra.mxu0 0.0
    %1740 = vmatpush.msra.mxu0 0.0
    %1741 = vmatpush.msra.mxu0 0.0
    %1742 = vmatpush.msra.mxu0 %v1723
    %1743 = vmatmul.f32.gmra.mxu0 %v1721
    %v1744 = vpop.f32.mrf.mxu0
    %v1745 = vadd.f32 0.0, %v1744
    %1746 = vdwg.mxu0
    %1747 = vmatpush.msra.mxu0 0.0
    %1748 = vmatpush.msra.mxu0 0.0
    %1749 = vmatpush.msra.mxu0 0.0
    %1750 = vmatpush.msra.mxu0 0.0
    %1751 = vmatpush.msra.mxu0 0.0
    %1752 = vmatpush.msra.mxu0 0.0
    %1753 = vmatpush.msra.mxu0 0.0
    %1754 = vmatpush.msra.mxu0 0.0
    %1755 = vmatpush.msra.mxu0 0.0
    %1756 = vmatpush.msra.mxu0 0.0
    %1757 = vmatpush.msra.mxu0 0.0
    %1758 = vmatpush.msra.mxu0 0.0
    %1759 = vmatpush.msra.mxu0 0.0
    %1760 = vmatpush.msra.mxu0 0.0
    %1761 = vmatpush.msra.mxu0 0.0
    %1762 = vmatpush.msra.mxu0 %v1725
    %1763 = vmatmul.f32.gmra.mxu0 %v1721
    %v1764 = vpop.f32.mrf.mxu0
    %v1765 = vadd.f32 0.0, %v1764
    %1766 = vdwg.mxu0
    %v1767 = vadd.f32 %v1679, %v1745
    %v1768 = vadd.f32 %v1699, %v1765
    %v1769 = vmul.f32 %v1380, %v631
    %v1770 = vmul.f32 %v1381, %v632
    %v1771 = vadd.f32 %v1567, %v1769
    %v1772 = vadd.f32 %v1568, %v1770
    %v1773 = vmul.f32 %v1767, %v640
    %v1774 = vmul.f32 %v1768, %v641
    %v1775 = vadd.f32 %v1771, %v1773
    %v1776 = vadd.f32 %v1772, %v1774
    %v1777 = vld [vmem:[%s3] sm:$0xff]
    %1779 = vset.pattern.permute.xlu0 0
    %1780 = vperm.xlu0 %1779, %v1777
    %v1781 = vpop.permute.xlu0 %1780
    %v1783 = vadd.f32 %v1775, %v1781
    %v1784 = vadd.f32 %v1776, %v1781
    %v1785 = vmax.f32 %v1783, 0.0
    %v1786 = vmax.f32 %v1784, 0.0
    %1787 = vst [vmem:[#allocation2 + $0x8] sm:$0xff] %v1785
    %1788 = vst [vmem:[#allocation2 + $0x10] sm:$0xff] %v1786
    %v1789 = vld [vmem:[%s4] sm:$0xf]
    %v1790 = vld [vmem:[#allocation2] sm:$0xff]
    %v1791 = vld [vmem:[#allocation2 + $0x8] sm:$0xff]
    %v1792 = vld [vmem:[#allocation2 + $0x10] sm:$0xff]
    %v1793 = vld [vmem:[%s664] sm:$0xf]
    %1797 = vrot.lane.b32.xlu0 %v1790, 1
    %v1798 = vpop.permute.xlu0 %1797
    %1799 = vrot.lane.b32.xlu0 %v1791, 1
    %v1800 = vpop.permute.xlu0 %1799
    %1801 = vrot.lane.b32.xlu0 %v1792, 1
    %v1802 = vpop.permute.xlu0 %1801
    %v1803 = vsel %vm48, %v1798, %v1800
    %v1804 = vsel %vm48, %v1800, %v1802
    %v1808 = vsel %vm679, %v1793, 0
    %1810 = vmatpush.msra.mxu0 0.0
    %1811 = vmatpush.msra.mxu0 0.0
    %1812 = vmatpush.msra.mxu0 0.0
    %1813 = vmatpush.msra.mxu0 0.0
    %1814 = vmatpush.msra.mxu0 0.0
    %1815 = vmatpush.msra.mxu0 0.0
    %1816 = vmatpush.msra.mxu0 0.0
    %1817 = vmatpush.msra.mxu0 0.0
    %1818 = vmatpush.msra.mxu0 0.0
    %1819 = vmatpush.msra.mxu0 0.0
    %1820 = vmatpush.msra.mxu0 0.0
    %1821 = vmatpush.msra.mxu0 0.0
    %1822 = vmatpush.msra.mxu0 0.0
    %1823 = vmatpush.msra.mxu0 0.0
    %1824 = vmatpush.msra.mxu0 0.0
    %1825 = vmatpush.msra.mxu0 %v1803
    %1826 = vmatmul.f32.gmra.mxu0 %v1808
    %v1827 = vpop.f32.mrf.mxu0
    %v1828 = vadd.f32 0.0, %v1827
    %1829 = vdwg.mxu0
    %1830 = vmatpush.msra.mxu0 0.0
    %1831 = vmatpush.msra.mxu0 0.0
    %1832 = vmatpush.msra.mxu0 0.0
    %1833 = vmatpush.msra.mxu0 0.0
    %1834 = vmatpush.msra.mxu0 0.0
    %1835 = vmatpush.msra.mxu0 0.0
    %1836 = vmatpush.msra.mxu0 0.0
    %1837 = vmatpush.msra.mxu0 0.0
    %1838 = vmatpush.msra.mxu0 0.0
    %1839 = vmatpush.msra.mxu0 0.0
    %1840 = vmatpush.msra.mxu0 0.0
    %1841 = vmatpush.msra.mxu0 0.0
    %1842 = vmatpush.msra.mxu0 0.0
    %1843 = vmatpush.msra.mxu0 0.0
    %1844 = vmatpush.msra.mxu0 0.0
    %1845 = vmatpush.msra.mxu0 %v1804
    %1846 = vmatmul.f32.gmra.mxu0 %v1808
    %v1847 = vpop.f32.mrf.mxu0
    %v1848 = vadd.f32 0.0, %v1847
    %1849 = vdwg.mxu0
    %1850 = vrot.lane.b32.xlu0 %v1790, 17
    %v1851 = vpop.permute.xlu0 %1850
    %1852 = vrot.lane.b32.xlu0 %v1791, 17
    %v1853 = vpop.permute.xlu0 %1852
    %1854 = vrot.lane.b32.xlu0 %v1792, 17
    %v1855 = vpop.permute.xlu0 %1854
    %v1856 = vsel %vm112, %v1851, %v1853
    %v1857 = vsel %vm112, %v1853, %v1855
    %v1861 = vsel %vm679, %v1789, 0
    %1863 = vmatpush.msra.mxu0 0.0
    %1864 = vmatpush.msra.mxu0 0.0
    %1865 = vmatpush.msra.mxu0 0.0
    %1866 = vmatpush.msra.mxu0 0.0
    %1867 = vmatpush.msra.mxu0 0.0
    %1868 = vmatpush.msra.mxu0 0.0
    %1869 = vmatpush.msra.mxu0 0.0
    %1870 = vmatpush.msra.mxu0 0.0
    %1871 = vmatpush.msra.mxu0 0.0
    %1872 = vmatpush.msra.mxu0 0.0
    %1873 = vmatpush.msra.mxu0 0.0
    %1874 = vmatpush.msra.mxu0 0.0
    %1875 = vmatpush.msra.mxu0 0.0
    %1876 = vmatpush.msra.mxu0 0.0
    %1877 = vmatpush.msra.mxu0 0.0
    %1878 = vmatpush.msra.mxu0 %v1856
    %1879 = vmatmul.f32.gmra.mxu0 %v1861
    %v1880 = vpop.f32.mrf.mxu0
    %v1881 = vadd.f32 %v1828, %v1880
    %1882 = vdwg.mxu0
    %1883 = vmatpush.msra.mxu0 0.0
    %1884 = vmatpush.msra.mxu0 0.0
    %1885 = vmatpush.msra.mxu0 0.0
    %1886 = vmatpush.msra.mxu0 0.0
    %1887 = vmatpush.msra.mxu0 0.0
    %1888 = vmatpush.msra.mxu0 0.0
    %1889 = vmatpush.msra.mxu0 0.0
    %1890 = vmatpush.msra.mxu0 0.0
    %1891 = vmatpush.msra.mxu0 0.0
    %1892 = vmatpush.msra.mxu0 0.0
    %1893 = vmatpush.msra.mxu0 0.0
    %1894 = vmatpush.msra.mxu0 0.0
    %1895 = vmatpush.msra.mxu0 0.0
    %1896 = vmatpush.msra.mxu0 0.0
    %1897 = vmatpush.msra.mxu0 0.0
    %1898 = vmatpush.msra.mxu0 %v1857
    %1899 = vmatmul.f32.gmra.mxu0 %v1861
    %v1900 = vpop.f32.mrf.mxu0
    %v1901 = vadd.f32 %v1848, %v1900
    %1902 = vdwg.mxu0
    %v1903 = vld [vmem:[%s776] sm:$0xf]
    %v1904 = vld [vmem:[#allocation2 + $0x8] sm:$0xff]
    %v1905 = vld [vmem:[#allocation2 + $0x10] sm:$0xff]
    %v1906 = vld [vmem:[#allocation2 + $0x18] sm:$0xff]
    %1910 = vrot.lane.b32.xlu0 %v1904, 113
    %v1911 = vpop.permute.xlu0 %1910
    %1912 = vrot.lane.b32.xlu0 %v1905, 113
    %v1913 = vpop.permute.xlu0 %1912
    %1914 = vrot.lane.b32.xlu0 %v1906, 113
    %v1915 = vpop.permute.xlu0 %1914
    %v1916 = vsel %vm180, %v1911, %v1913
    %v1917 = vsel %vm180, %v1913, %v1915
    %v1921 = vsel %vm679, %v1903, 0
    %1923 = vmatpush.msra.mxu0 0.0
    %1924 = vmatpush.msra.mxu0 0.0
    %1925 = vmatpush.msra.mxu0 0.0
    %1926 = vmatpush.msra.mxu0 0.0
    %1927 = vmatpush.msra.mxu0 0.0
    %1928 = vmatpush.msra.mxu0 0.0
    %1929 = vmatpush.msra.mxu0 0.0
    %1930 = vmatpush.msra.mxu0 0.0
    %1931 = vmatpush.msra.mxu0 0.0
    %1932 = vmatpush.msra.mxu0 0.0
    %1933 = vmatpush.msra.mxu0 0.0
    %1934 = vmatpush.msra.mxu0 0.0
    %1935 = vmatpush.msra.mxu0 0.0
    %1936 = vmatpush.msra.mxu0 0.0
    %1937 = vmatpush.msra.mxu0 0.0
    %1938 = vmatpush.msra.mxu0 %v1916
    %1939 = vmatmul.f32.gmra.mxu0 %v1921
    %v1940 = vpop.f32.mrf.mxu0
    %v1941 = vadd.f32 0.0, %v1940
    %1942 = vdwg.mxu0
    %1943 = vmatpush.msra.mxu0 0.0
    %1944 = vmatpush.msra.mxu0 0.0
    %1945 = vmatpush.msra.mxu0 0.0
    %1946 = vmatpush.msra.mxu0 0.0
    %1947 = vmatpush.msra.mxu0 0.0
    %1948 = vmatpush.msra.mxu0 0.0
    %1949 = vmatpush.msra.mxu0 0.0
    %1950 = vmatpush.msra.mxu0 0.0
    %1951 = vmatpush.msra.mxu0 0.0
    %1952 = vmatpush.msra.mxu0 0.0
    %1953 = vmatpush.msra.mxu0 0.0
    %1954 = vmatpush.msra.mxu0 0.0
    %1955 = vmatpush.msra.mxu0 0.0
    %1956 = vmatpush.msra.mxu0 0.0
    %1957 = vmatpush.msra.mxu0 0.0
    %1958 = vmatpush.msra.mxu0 %v1917
    %1959 = vmatmul.f32.gmra.mxu0 %v1921
    %v1960 = vpop.f32.mrf.mxu0
    %v1961 = vadd.f32 0.0, %v1960
    %1962 = vdwg.mxu0
    %v1963 = vadd.f32 %v1881, %v1941
    %v1964 = vadd.f32 %v1901, %v1961
    %v1965 = vld [vmem:[%s839] sm:$0xf]
    %v1966 = vld [vmem:[%s841] sm:$0xf]
    %v1968 = vsel %vm679, %v1966, 0
    %1970 = vmatpush.msra.mxu0 0.0
    %1971 = vmatpush.msra.mxu0 0.0
    %1972 = vmatpush.msra.mxu0 0.0
    %1973 = vmatpush.msra.mxu0 0.0
    %1974 = vmatpush.msra.mxu0 0.0
    %1975 = vmatpush.msra.mxu0 0.0
    %1976 = vmatpush.msra.mxu0 0.0
    %1977 = vmatpush.msra.mxu0 0.0
    %1978 = vmatpush.msra.mxu0 0.0
    %1979 = vmatpush.msra.mxu0 0.0
    %1980 = vmatpush.msra.mxu0 0.0
    %1981 = vmatpush.msra.mxu0 0.0
    %1982 = vmatpush.msra.mxu0 0.0
    %1983 = vmatpush.msra.mxu0 0.0
    %1984 = vmatpush.msra.mxu0 0.0
    %1985 = vmatpush.msra.mxu0 %v1791
    %1986 = vmatmul.f32.gmra.mxu0 %v1968
    %v1987 = vpop.f32.mrf.mxu0
    %v1988 = vadd.f32 0.0, %v1987
    %1989 = vdwg.mxu0
    %1990 = vmatpush.msra.mxu0 0.0
    %1991 = vmatpush.msra.mxu0 0.0
    %1992 = vmatpush.msra.mxu0 0.0
    %1993 = vmatpush.msra.mxu0 0.0
    %1994 = vmatpush.msra.mxu0 0.0
    %1995 = vmatpush.msra.mxu0 0.0
    %1996 = vmatpush.msra.mxu0 0.0
    %1997 = vmatpush.msra.mxu0 0.0
    %1998 = vmatpush.msra.mxu0 0.0
    %1999 = vmatpush.msra.mxu0 0.0
    %2000 = vmatpush.msra.mxu0 0.0
    %2001 = vmatpush.msra.mxu0 0.0
    %2002 = vmatpush.msra.mxu0 0.0
    %2003 = vmatpush.msra.mxu0 0.0
    %2004 = vmatpush.msra.mxu0 0.0
    %2005 = vmatpush.msra.mxu0 %v1792
    %2006 = vmatmul.f32.gmra.mxu0 %v1968
    %v2007 = vpop.f32.mrf.mxu0
    %v2008 = vadd.f32 0.0, %v2007
    %2009 = vdwg.mxu0
    %2010 = vrot.lane.b32.xlu0 %v1790, 16
    %v2011 = vpop.permute.xlu0 %2010
    %2012 = vrot.lane.b32.xlu0 %v1791, 16
    %v2013 = vpop.permute.xlu0 %2012
    %2014 = vrot.lane.b32.xlu0 %v1792, 16
    %v2015 = vpop.permute.xlu0 %2014
    %v2016 = vsel %vm304, %v2011, %v2013
    %v2017 = vsel %vm304, %v2013, %v2015
    %v2021 = vsel %vm679, %v1965, 0
    %2023 = vmatpush.msra.mxu0 0.0
    %2024 = vmatpush.msra.mxu0 0.0
    %2025 = vmatpush.msra.mxu0 0.0
    %2026 = vmatpush.msra.mxu0 0.0
    %2027 = vmatpush.msra.mxu0 0.0
    %2028 = vmatpush.msra.mxu0 0.0
    %2029 = vmatpush.msra.mxu0 0.0
    %2030 = vmatpush.msra.mxu0 0.0
    %2031 = vmatpush.msra.mxu0 0.0
    %2032 = vmatpush.msra.mxu0 0.0
    %2033 = vmatpush.msra.mxu0 0.0
    %2034 = vmatpush.msra.mxu0 0.0
    %2035 = vmatpush.msra.mxu0 0.0
    %2036 = vmatpush.msra.mxu0 0.0
    %2037 = vmatpush.msra.mxu0 0.0
    %2038 = vmatpush.msra.mxu0 %v2016
    %2039 = vmatmul.f32.gmra.mxu0 %v2021
    %v2040 = vpop.f32.mrf.mxu0
    %v2041 = vadd.f32 %v1988, %v2040
    %2042 = vdwg.mxu0
    %2043 = vmatpush.msra.mxu0 0.0
    %2044 = vmatpush.msra.mxu0 0.0
    %2045 = vmatpush.msra.mxu0 0.0
    %2046 = vmatpush.msra.mxu0 0.0
    %2047 = vmatpush.msra.mxu0 0.0
    %2048 = vmatpush.msra.mxu0 0.0
    %2049 = vmatpush.msra.mxu0 0.0
    %2050 = vmatpush.msra.mxu0 0.0
    %2051 = vmatpush.msra.mxu0 0.0
    %2052 = vmatpush.msra.mxu0 0.0
    %2053 = vmatpush.msra.mxu0 0.0
    %2054 = vmatpush.msra.mxu0 0.0
    %2055 = vmatpush.msra.mxu0 0.0
    %2056 = vmatpush.msra.mxu0 0.0
    %2057 = vmatpush.msra.mxu0 0.0
    %2058 = vmatpush.msra.mxu0 %v2017
    %2059 = vmatmul.f32.gmra.mxu0 %v2021
    %v2060 = vpop.f32.mrf.mxu0
    %v2061 = vadd.f32 %v2008, %v2060
    %2062 = vdwg.mxu0
    %v2063 = vld [vmem:[%s939] sm:$0xf]
    %2064 = vrot.lane.b32.xlu0 %v1904, 112
    %v2065 = vpop.permute.xlu0 %2064
    %2066 = vrot.lane.b32.xlu0 %v1905, 112
    %v2067 = vpop.permute.xlu0 %2066
    %2068 = vrot.lane.b32.xlu0 %v1906, 112
    %v2069 = vpop.permute.xlu0 %2068
    %v2070 = vsel %vm372, %v2065, %v2067
    %v2071 = vsel %vm372, %v2067, %v2069
    %v2075 = vsel %vm679, %v2063, 0
    %2077 = vmatpush.msra.mxu0 0.0
    %2078 = vmatpush.msra.mxu0 0.0
    %2079 = vmatpush.msra.mxu0 0.0
    %2080 = vmatpush.msra.mxu0 0.0
    %2081 = vmatpush.msra.mxu0 0.0
    %2082 = vmatpush.msra.mxu0 0.0
    %2083 = vmatpush.msra.mxu0 0.0
    %2084 = vmatpush.msra.mxu0 0.0
    %2085 = vmatpush.msra.mxu0 0.0
    %2086 = vmatpush.msra.mxu0 0.0
    %2087 = vmatpush.msra.mxu0 0.0
    %2088 = vmatpush.msra.mxu0 0.0
    %2089 = vmatpush.msra.mxu0 0.0
    %2090 = vmatpush.msra.mxu0 0.0
    %2091 = vmatpush.msra.mxu0 0.0
    %2092 = vmatpush.msra.mxu0 %v2070
    %2093 = vmatmul.f32.gmra.mxu0 %v2075
    %v2094 = vpop.f32.mrf.mxu0
    %v2095 = vadd.f32 0.0, %v2094
    %2096 = vdwg.mxu0
    %2097 = vmatpush.msra.mxu0 0.0
    %2098 = vmatpush.msra.mxu0 0.0
    %2099 = vmatpush.msra.mxu0 0.0
    %2100 = vmatpush.msra.mxu0 0.0
    %2101 = vmatpush.msra.mxu0 0.0
    %2102 = vmatpush.msra.mxu0 0.0
    %2103 = vmatpush.msra.mxu0 0.0
    %2104 = vmatpush.msra.mxu0 0.0
    %2105 = vmatpush.msra.mxu0 0.0
    %2106 = vmatpush.msra.mxu0 0.0
    %2107 = vmatpush.msra.mxu0 0.0
    %2108 = vmatpush.msra.mxu0 0.0
    %2109 = vmatpush.msra.mxu0 0.0
    %2110 = vmatpush.msra.mxu0 0.0
    %2111 = vmatpush.msra.mxu0 0.0
    %2112 = vmatpush.msra.mxu0 %v2071
    %2113 = vmatmul.f32.gmra.mxu0 %v2075
    %v2114 = vpop.f32.mrf.mxu0
    %v2115 = vadd.f32 0.0, %v2114
    %2116 = vdwg.mxu0
    %v2117 = vadd.f32 %v2041, %v2095
    %v2118 = vadd.f32 %v2061, %v2115
    %v2119 = vld [vmem:[%s996] sm:$0xf]
    %v2120 = vld [vmem:[%s998] sm:$0xf]
    %2121 = vrot.lane.b32.xlu0 %v1904, 127
    %v2122 = vpop.permute.xlu0 %2121
    %2123 = vrot.lane.b32.xlu0 %v1905, 127
    %v2124 = vpop.permute.xlu0 %2123
    %2125 = vrot.lane.b32.xlu0 %v1906, 127
    %v2126 = vpop.permute.xlu0 %2125
    %v2127 = vsel %vm446, %v2122, %v2124
    %v2128 = vsel %vm446, %v2124, %v2126
    %v2132 = vsel %vm679, %v2120, 0
    %2134 = vmatpush.msra.mxu0 0.0
    %2135 = vmatpush.msra.mxu0 0.0
    %2136 = vmatpush.msra.mxu0 0.0
    %2137 = vmatpush.msra.mxu0 0.0
    %2138 = vmatpush.msra.mxu0 0.0
    %2139 = vmatpush.msra.mxu0 0.0
    %2140 = vmatpush.msra.mxu0 0.0
    %2141 = vmatpush.msra.mxu0 0.0
    %2142 = vmatpush.msra.mxu0 0.0
    %2143 = vmatpush.msra.mxu0 0.0
    %2144 = vmatpush.msra.mxu0 0.0
    %2145 = vmatpush.msra.mxu0 0.0
    %2146 = vmatpush.msra.mxu0 0.0
    %2147 = vmatpush.msra.mxu0 0.0
    %2148 = vmatpush.msra.mxu0 0.0
    %2149 = vmatpush.msra.mxu0 %v2127
    %2150 = vmatmul.f32.gmra.mxu0 %v2132
    %v2151 = vpop.f32.mrf.mxu0
    %v2152 = vadd.f32 0.0, %v2151
    %2153 = vdwg.mxu0
    %2154 = vmatpush.msra.mxu0 0.0
    %2155 = vmatpush.msra.mxu0 0.0
    %2156 = vmatpush.msra.mxu0 0.0
    %2157 = vmatpush.msra.mxu0 0.0
    %2158 = vmatpush.msra.mxu0 0.0
    %2159 = vmatpush.msra.mxu0 0.0
    %2160 = vmatpush.msra.mxu0 0.0
    %2161 = vmatpush.msra.mxu0 0.0
    %2162 = vmatpush.msra.mxu0 0.0
    %2163 = vmatpush.msra.mxu0 0.0
    %2164 = vmatpush.msra.mxu0 0.0
    %2165 = vmatpush.msra.mxu0 0.0
    %2166 = vmatpush.msra.mxu0 0.0
    %2167 = vmatpush.msra.mxu0 0.0
    %2168 = vmatpush.msra.mxu0 0.0
    %2169 = vmatpush.msra.mxu0 %v2128
    %2170 = vmatmul.f32.gmra.mxu0 %v2132
    %v2171 = vpop.f32.mrf.mxu0
    %v2172 = vadd.f32 0.0, %v2171
    %2173 = vdwg.mxu0
    %2174 = vrot.lane.b32.xlu0 %v1790, 15
    %v2175 = vpop.permute.xlu0 %2174
    %2176 = vrot.lane.b32.xlu0 %v1791, 15
    %v2177 = vpop.permute.xlu0 %2176
    %2178 = vrot.lane.b32.xlu0 %v1792, 15
    %v2179 = vpop.permute.xlu0 %2178
    %v2180 = vsel %vm510, %v2175, %v2177
    %v2181 = vsel %vm510, %v2177, %v2179
    %v2185 = vsel %vm679, %v2119, 0
    %2187 = vmatpush.msra.mxu0 0.0
    %2188 = vmatpush.msra.mxu0 0.0
    %2189 = vmatpush.msra.mxu0 0.0
    %2190 = vmatpush.msra.mxu0 0.0
    %2191 = vmatpush.msra.mxu0 0.0
    %2192 = vmatpush.msra.mxu0 0.0
    %2193 = vmatpush.msra.mxu0 0.0
    %2194 = vmatpush.msra.mxu0 0.0
    %2195 = vmatpush.msra.mxu0 0.0
    %2196 = vmatpush.msra.mxu0 0.0
    %2197 = vmatpush.msra.mxu0 0.0
    %2198 = vmatpush.msra.mxu0 0.0
    %2199 = vmatpush.msra.mxu0 0.0
    %2200 = vmatpush.msra.mxu0 0.0
    %2201 = vmatpush.msra.mxu0 0.0
    %2202 = vmatpush.msra.mxu0 %v2180
    %2203 = vmatmul.f32.gmra.mxu0 %v2185
    %v2204 = vpop.f32.mrf.mxu0
    %v2205 = vadd.f32 %v2152, %v2204
    %2206 = vdwg.mxu0
    %2207 = vmatpush.msra.mxu0 0.0
    %2208 = vmatpush.msra.mxu0 0.0
    %2209 = vmatpush.msra.mxu0 0.0
    %2210 = vmatpush.msra.mxu0 0.0
    %2211 = vmatpush.msra.mxu0 0.0
    %2212 = vmatpush.msra.mxu0 0.0
    %2213 = vmatpush.msra.mxu0 0.0
    %2214 = vmatpush.msra.mxu0 0.0
    %2215 = vmatpush.msra.mxu0 0.0
    %2216 = vmatpush.msra.mxu0 0.0
    %2217 = vmatpush.msra.mxu0 0.0
    %2218 = vmatpush.msra.mxu0 0.0
    %2219 = vmatpush.msra.mxu0 0.0
    %2220 = vmatpush.msra.mxu0 0.0
    %2221 = vmatpush.msra.mxu0 0.0
    %2222 = vmatpush.msra.mxu0 %v2181
    %2223 = vmatmul.f32.gmra.mxu0 %v2185
    %v2224 = vpop.f32.mrf.mxu0
    %v2225 = vadd.f32 %v2172, %v2224
    %2226 = vdwg.mxu0
    %v2227 = vld [vmem:[%s1106] sm:$0xf]
    %2228 = vrot.lane.b32.xlu0 %v1904, 111
    %v2229 = vpop.permute.xlu0 %2228
    %2230 = vrot.lane.b32.xlu0 %v1905, 111
    %v2231 = vpop.permute.xlu0 %2230
    %2232 = vrot.lane.b32.xlu0 %v1906, 111
    %v2233 = vpop.permute.xlu0 %2232
    %v2234 = vsel %vm578, %v2229, %v2231
    %v2235 = vsel %vm578, %v2231, %v2233
    %v2239 = vsel %vm679, %v2227, 0
    %2241 = vmatpush.msra.mxu0 0.0
    %2242 = vmatpush.msra.mxu0 0.0
    %2243 = vmatpush.msra.mxu0 0.0
    %2244 = vmatpush.msra.mxu0 0.0
    %2245 = vmatpush.msra.mxu0 0.0
    %2246 = vmatpush.msra.mxu0 0.0
    %2247 = vmatpush.msra.mxu0 0.0
    %2248 = vmatpush.msra.mxu0 0.0
    %2249 = vmatpush.msra.mxu0 0.0
    %2250 = vmatpush.msra.mxu0 0.0
    %2251 = vmatpush.msra.mxu0 0.0
    %2252 = vmatpush.msra.mxu0 0.0
    %2253 = vmatpush.msra.mxu0 0.0
    %2254 = vmatpush.msra.mxu0 0.0
    %2255 = vmatpush.msra.mxu0 0.0
    %2256 = vmatpush.msra.mxu0 %v2234
    %2257 = vmatmul.f32.gmra.mxu0 %v2239
    %v2258 = vpop.f32.mrf.mxu0
    %v2259 = vadd.f32 0.0, %v2258
    %2260 = vdwg.mxu0
    %2261 = vmatpush.msra.mxu0 0.0
    %2262 = vmatpush.msra.mxu0 0.0
    %2263 = vmatpush.msra.mxu0 0.0
    %2264 = vmatpush.msra.mxu0 0.0
    %2265 = vmatpush.msra.mxu0 0.0
    %2266 = vmatpush.msra.mxu0 0.0
    %2267 = vmatpush.msra.mxu0 0.0
    %2268 = vmatpush.msra.mxu0 0.0
    %2269 = vmatpush.msra.mxu0 0.0
    %2270 = vmatpush.msra.mxu0 0.0
    %2271 = vmatpush.msra.mxu0 0.0
    %2272 = vmatpush.msra.mxu0 0.0
    %2273 = vmatpush.msra.mxu0 0.0
    %2274 = vmatpush.msra.mxu0 0.0
    %2275 = vmatpush.msra.mxu0 0.0
    %2276 = vmatpush.msra.mxu0 %v2235
    %2277 = vmatmul.f32.gmra.mxu0 %v2239
    %v2278 = vpop.f32.mrf.mxu0
    %v2279 = vadd.f32 0.0, %v2278
    %2280 = vdwg.mxu0
    %v2281 = vadd.f32 %v2205, %v2259
    %v2282 = vadd.f32 %v2225, %v2279
    %v2283 = vmul.f32 %v1963, %v631
    %v2284 = vmul.f32 %v1964, %v632
    %v2285 = vadd.f32 %v2117, %v2283
    %v2286 = vadd.f32 %v2118, %v2284
    %v2287 = vmul.f32 %v2281, %v640
    %v2288 = vmul.f32 %v2282, %v641
    %v2289 = vadd.f32 %v2285, %v2287
    %v2290 = vadd.f32 %v2286, %v2288
    %v2291 = vld [vmem:[%s5] sm:$0xf]
    %2293 = vset.pattern.permute.xlu0 0
    %2294 = vperm.xlu0 %2293, %v2291
    %v2295 = vpop.permute.xlu0 %2294
    %v2297 = vadd.f32 %v2289, %v2295
    %v2298 = vadd.f32 %v2290, %v2295
    %v2301 = vrot.slane %v2298, 4
    %v2302 = vsel %vm55, %v2297, %v2301
    %s2304 = scalar_lea.vmem [#allocation3], 8
    %2305 = vst [vmem:[%s2304] sm:$0xff] %v2302
    // Predicated region
    $region26: #{tpu_custom_call.1} parent=1 // pred_check
      _
    $region27: #{tpu_custom_call.1} parent=1 // pred_check_branch
      %2307 = sbr.rel (0) target = $region29
    $region28: #{tpu_custom_call.1} parent=1 // pred_region
      %2309 = vsyncadd [#allocation4], 0
      %s2310 = sshll.u32 [#allocation3], 4
      %s2311 = int_to_ptr.vmem [resolvable:$true] %s2310
      %s2312 = sshll.u32 %s6, 4
      %s2313 = int_to_ptr.hbm [resolvable:$true] %s2312
      %2318 = dma.vmem_to_hbm [thread:$0]  %s2311, 256, %s2313, [#allocation4], 128, 128, 8
    $region29: #{tpu_custom_call.1} parent=1 // pred_fallthru
      _
    // Predicated region
    $region30: #{tpu_custom_call.1} parent=1 // pred_check
      _
    $region31: #{tpu_custom_call.1} parent=1 // pred_check_branch
      %2320 = sbr.rel (0) target = $region33
    $region32: #{tpu_custom_call.1} parent=1 // pred_region
      %2322 = dma.done [#allocation4], 256
    $region33: #{tpu_custom_call.1} parent=1 // pred_fallthru
      _
    %2323 = vsyncpa [#allocation4], 1

</llo_original>
